<compile_context>
chip_gen: v5e
topology: v5e:2x2
jax: 0.10.0
libtpu: 0.0.40
codegen_flags: <defaults>
</compile_context>

<pallas_src>
import math

import numpy as np

import jax
import jax.numpy as jnp
from jax.experimental import pallas as pl
from jax.experimental.pallas import tpu as pltpu


def _round_up(v, m):
    return ((v + m - 1) // m) * m


def _build_tables(num_frequencies, in_features):
    """Per-output-column constants, passed to the kernel as inputs.

    coef[k, c]  = 2**(c // (2F)) * pi  if c % F == k else 0.0
    phase[0, c] = 0.0 for sin columns, f32(pi/2) for cos columns.
    2**i * pi is an exact power-of-two scaling of f32(pi), so the in-kernel
    f32 multiply matches the reference's rounding bit for bit.
    """
    F = in_features
    out_dim = 2 * num_frequencies * F
    coef = np.zeros((F, out_dim), dtype=np.float32)
    phase = np.zeros((1, out_dim), dtype=np.float32)
    for c in range(out_dim):
        i = c // (2 * F)
        k = c % F
        coef[k, c] = np.float32((2.0 ** i) * math.pi)
        if (c // F) % 2 == 1:  # odd F-slab -> cos column
            phase[0, c] = np.float32(math.pi / 2.0)
    return coef, phase


def _make_posenc_kernel(exact_cos):
    def kernel(x_ref, coef_ref, phase_ref, o_ref):
        F = x_ref.shape[-1]
        x = x_ref[...].astype(jnp.float32)      # (T, F)
        coef = coef_ref[...]                    # (F, out_dim) f32
        phase = phase_ref[...]                  # (1, out_dim) f32

        # arg[:, c] = x[:, c % F] * 2**(c//(2F)) * pi, built from F rank-1
        # (lane-splat feature) x (masked coefficient row) products. The
        # masked-out terms add an exact +0.0 -> bit-identical argument.
        arg = x[:, 0:1] * coef[0:1, :]
        for k in range(1, F):
            arg = arg + x[:, k:k + 1] * coef[k:k + 1, :]

        if exact_cos:
            # Two transcendental passes, cos columns use a true cos.
            is_cos = phase > 0.0
            out = jnp.where(is_cos, jnp.cos(arg), jnp.sin(arg))
        else:
            # Single transcendental pass: cos(a) = sin(a + pi/2). Deviation vs
            # the exact path is bounded by ~ulp(arg) (<= ~1e-4 for |x|<=1 at
            # the top frequency 512*pi), i.e. the same order as the rounding
            # already present in round(freq * x).
            out = jnp.sin(arg + phase)

        o_ref[...] = out.astype(o_ref.dtype)

    return kernel


def positional_encoding(x, num_frequencies=10, tile_rows=4096, out_dtype=None,
                        exact_cos=False):
    """Pallas TPU implementation of PositionalEncoding.forward.

    x: [..., in_features]
    returns: [..., 2 * num_frequencies * in_features]
    """
    in_features = x.shape[-1]
    out_dim = 2 * num_frequencies * in_features
    out_dtype = x.dtype if out_dtype is None else out_dtype

    lead_shape = x.shape[:-1]
    n = int(math.prod(lead_shape)) if lead_shape else 1
    x2d = x.reshape(n, in_features)

    coef_np, phase_np = _build_tables(num_frequencies, in_features)
    coef = jnp.asarray(coef_np)
    phase = jnp.asarray(phase_np)

    # Row tiling: large tiles amortize the ~0.35us/step pipeline overhead, but
    # cap at ~n/2 so the grid has >=2 steps and ("parallel",) can shard rows
    # across both v7x TensorCores. Ragged last block is handled by Pallas
    # (no pad of the input, no slice of the 20x-sized output).
    if n >= 8:
        tile = min(_round_up(tile_rows, 8), max(8, _round_up(pl.cdiv(n, 2), 8)))
    else:
        tile = n  # block == full array dim, allowed for tiny inputs
    grid = pl.cdiv(n, tile)

    kernel = _make_posenc_kernel(exact_cos)

    out2d = pl.pallas_call(
        kernel,
        out_shape=jax.ShapeDtypeStruct((n, out_dim), out_dtype),
        grid_spec=pltpu.PrefetchScalarGridSpec(
            num_scalar_prefetch=0,
            grid=(grid,),
            in_specs=[
                pl.BlockSpec((tile, in_features), lambda i: (i, 0)),
                pl.BlockSpec((in_features, out_dim), lambda i: (0, 0)),
                pl.BlockSpec((1, out_dim), lambda i: (0, 0)),
            ],
            out_specs=pl.BlockSpec((tile, out_dim), lambda i: (i, 0)),
        ),
        compiler_params=pltpu.CompilerParams(
            dimension_semantics=("parallel",),
            vmem_limit_bytes=48 * 1024 * 1024,
        ),
    )(x2d, coef, phase)

    return out2d.reshape(*lead_shape, out_dim)


def _reference(x, num_frequencies=10):
    """Pure-JAX reference mirroring the PyTorch forward exactly."""
    freq_bands = (2.0 ** jnp.linspace(0.0, num_frequencies - 1, num_frequencies)) * jnp.pi
    outs = []
    for freq in freq_bands:
        for fn in (jnp.sin, jnp.cos):
            outs.append(fn(freq * x))
    return jnp.concatenate(outs, axis=-1)


if __name__ == "__main__":
    key = jax.random.PRNGKey(0)
    # NeRF-like shapes: batch=2, 64 points, in_features=3 (xyz) in [-1, 1).
    # out_dim = 2 * 10 * 3 = 60.
    x = jax.random.uniform(key, (2, 64, 3), dtype=jnp.float32, minval=-1.0, maxval=1.0)

    ref = _reference(x, num_frequencies=10)

    # Fast path (single sin pass, cos folded in via +pi/2 phase).
    out = jax.block_until_ready(positional_encoding(x, num_frequencies=10))
    assert out.shape == ref.shape == (2, 64, 60), out.shape
    assert jnp.allclose(out, ref, atol=1e-3, rtol=0.0), "mismatch (fast path)"

    # Exact-cos path (two transcendental passes).
    out_exact = jax.block_until_ready(positional_encoding(x, num_frequencies=10, exact_cos=True))
    assert jnp.allclose(out_exact, ref, atol=1e-3, rtol=0.0), "mismatch (exact path)"

    # Small tile that does NOT divide n=128 -> exercises the ragged last block
    # and a multi-step grid (no pad / no slice in the wrapper).
    out_ragged = jax.block_until_ready(positional_encoding(x, num_frequencies=10, tile_rows=40))
    assert out_ragged.shape == ref.shape
    assert jnp.allclose(out_ragged, ref, atol=1e-3, rtol=0.0), "mismatch (ragged grid)"

    # Opt-in bf16 output (halves the HBM writeback; precision change is opt-in).
    out_bf16 = jax.block_until_ready(
        positional_encoding(x, num_frequencies=10, out_dtype=jnp.bfloat16))
    assert out_bf16.dtype == jnp.bfloat16
    assert jnp.allclose(out_bf16.astype(jnp.float32), ref, atol=2e-2, rtol=0.0), "mismatch (bf16)"

    print("KERNEL_OK")
</pallas_src>

<mosaic_0001>
module attributes {stable_mosaic.version = 11 : i64} {
  func.func @kernel(%arg0: i32, %arg1: memref<64x3xf32, #tpu.memory_space<vmem>>, %arg2: memref<3x60xf32, #tpu.memory_space<vmem>>, %arg3: memref<1x60xf32, #tpu.memory_space<vmem>>, %arg4: memref<64x60xf32, #tpu.memory_space<vmem>>) attributes {dimension_semantics = [#tpu.dimension_semantics<parallel>], iteration_bounds = array<i64: 2>, scalar_prefetch = 0 : i64, scratch_operands = 0 : i64, tpu.core_type = #tpu.core_type<tc>, window_params = [{transform_indices = @transform_0, window_bounds = array<i64: 64, 3>}, {pipeline_mode = #tpu.pipeline_mode<synchronous>, transform_indices = @transform_1, window_bounds = array<i64: 3, 60>}, {pipeline_mode = #tpu.pipeline_mode<synchronous>, transform_indices = @transform_2, window_bounds = array<i64: 1, 60>}, {transform_indices = @transform_3, window_bounds = array<i64: 64, 60>}]} {
    %c0 = arith.constant 0 : index
    %c0_0 = arith.constant 0 : index
    %0 = vector.load %arg1[%c0, %c0_0] : memref<64x3xf32, #tpu.memory_space<vmem>>, vector<64x3xf32>
    %c0_1 = arith.constant 0 : index
    %c0_2 = arith.constant 0 : index
    %1 = vector.load %arg2[%c0_1, %c0_2] : memref<3x60xf32, #tpu.memory_space<vmem>>, vector<3x60xf32>
    %c0_3 = arith.constant 0 : index
    %c0_4 = arith.constant 0 : index
    %2 = vector.load %arg3[%c0_3, %c0_4] : memref<1x60xf32, #tpu.memory_space<vmem>>, vector<1x60xf32>
    %3 = vector.extract_strided_slice %0 {offsets = [0, 0], sizes = [64, 1], strides = [1, 1]} : vector<64x3xf32> to vector<64x1xf32>
    %4 = vector.extract_strided_slice %1 {offsets = [0, 0], sizes = [1, 60], strides = [1, 1]} : vector<3x60xf32> to vector<1x60xf32>
    %5 = vector.broadcast %3 : vector<64x1xf32> to vector<64x60xf32>
    %6 = vector.broadcast %4 : vector<1x60xf32> to vector<64x60xf32>
    %7 = arith.mulf %5, %6 : vector<64x60xf32>
    %8 = vector.extract_strided_slice %0 {offsets = [0, 1], sizes = [64, 1], strides = [1, 1]} : vector<64x3xf32> to vector<64x1xf32>
    %9 = vector.extract_strided_slice %1 {offsets = [1, 0], sizes = [1, 60], strides = [1, 1]} : vector<3x60xf32> to vector<1x60xf32>
    %10 = vector.broadcast %8 : vector<64x1xf32> to vector<64x60xf32>
    %11 = vector.broadcast %9 : vector<1x60xf32> to vector<64x60xf32>
    %12 = arith.mulf %10, %11 : vector<64x60xf32>
    %13 = arith.addf %7, %12 : vector<64x60xf32>
    %14 = vector.extract_strided_slice %0 {offsets = [0, 2], sizes = [64, 1], strides = [1, 1]} : vector<64x3xf32> to vector<64x1xf32>
    %15 = vector.extract_strided_slice %1 {offsets = [2, 0], sizes = [1, 60], strides = [1, 1]} : vector<3x60xf32> to vector<1x60xf32>
    %16 = vector.broadcast %14 : vector<64x1xf32> to vector<64x60xf32>
    %17 = vector.broadcast %15 : vector<1x60xf32> to vector<64x60xf32>
    %18 = arith.mulf %16, %17 : vector<64x60xf32>
    %19 = arith.addf %13, %18 : vector<64x60xf32>
    %20 = vector.broadcast %2 : vector<1x60xf32> to vector<64x60xf32>
    %21 = arith.addf %19, %20 : vector<64x60xf32>
    %22 = math.sin %21 : vector<64x60xf32>
    %c0_5 = arith.constant 0 : index
    %c0_6 = arith.constant 0 : index
    %23 = vector.load %arg4[%c0_5, %c0_6] : memref<64x60xf32, #tpu.memory_space<vmem>>, vector<64x60xf32>
    tpu.vector_store %arg4[%c0_5, %c0_6], %22 {strides = array<i32>} : memref<64x60xf32, #tpu.memory_space<vmem>>, vector<64x60xf32>,
    return
  }
  func.func @transform_0(%arg0: i32) -> (i32, i32) {
    %c0_i32 = arith.constant 0 : i32
    %c0_i32_0 = arith.constant 0 : i32
    return %arg0, %c0_i32 : i32, i32
  }
  func.func @transform_1(%arg0: i32) -> (i32, i32) {
    %c0_i32 = arith.constant 0 : i32
    %c0_i32_0 = arith.constant 0 : i32
    %c0_i32_1 = arith.constant 0 : i32
    return %c0_i32, %c0_i32_0 : i32, i32
  }
  func.func @transform_2(%arg0: i32) -> (i32, i32) {
    %c0_i32 = arith.constant 0 : i32
    %c0_i32_0 = arith.constant 0 : i32
    %c0_i32_1 = arith.constant 0 : i32
    return %c0_i32, %c0_i32_0 : i32, i32
  }
  func.func @transform_3(%arg0: i32) -> (i32, i32) {
    %c0_i32 = arith.constant 0 : i32
    %c0_i32_0 = arith.constant 0 : i32
    return %arg0, %c0_i32 : i32, i32
  }
}

</mosaic_0001>

<llo_original>
// kernel: tpu_custom_call.1
$region0: #{tpu_custom_call.1}
  #allocation0 [shape = 'u32[]', space=smem, size = 0x4, offset = 0x4, fixed_abs, tag = 'smem constant byte address 0x4 - core index']
  #allocation1 [shape = 'u32[72,128]{1,0:T(1,128)}', space=vmem, size = 0x9000, scoped, tag = 'internal scratch']
  %s0 = inlined_call_operand.vmem [shape: f32[128,3], index: 0, kind: input, shape index: {}]
  %s1 = inlined_call_operand.vmem [shape: f32[3,60], index: 1, kind: input, shape index: {}]
  %s2 = inlined_call_operand.vmem [shape: f32[1,60], index: 2, kind: input, shape index: {}]
  %s3 = inlined_call_operand.vmem [shape: f32[128,60], index: 3, kind: output, shape index: {}]
  %s4 = sld [smem:[#allocation0]]
  $region45: #{tpu_custom_call.1} parent=0
    _
  %s6 = ssub.s32 1, %s4
  %s7 = scalar_select 0, %s6, %s4
  loop: start=0, step=1, limit=4
  $region2: #{tpu_custom_call.1} parent=0 // loop_pre_header
    _
  $region3: #{tpu_custom_call.1} parent=0 // loop_header
    %s9 = sphi 0, %s13
    %p10 = scmp.ge.s32.totalorder %s9, 4
    %s19 = sphi 0, %s21
    %s22 = sphi 0, %s19
    %s23 = sphi 0, %s22
    %s39 = sphi 0, %s23
    %s43 = sphi 0, %s43
    %s45 = sphi 0, %s43
    %s46 = sphi 0, %s45
    %s60 = sphi 0, %s46
    %s64 = sphi 0, %s64
    %s66 = sphi 0, %s64
    %s67 = sphi 0, %s66
    %s81 = sphi 0, %s67
    %s87 = sphi 0, %s89
    %s90 = sphi 0, %s87
    %s91 = sphi 0, %s90
    %s107 = sphi 0, %s91
  $region4: #{tpu_custom_call.1} parent=0 // loop_header_branch
    %12 = sbr.rel (%p10) target = $region8
  $region5: #{tpu_custom_call.1} parent=0 // loop_body
    %s14 = ssub.s32 %s9, 1
    %s15 = ssub.s32 %s9, 2
    %s16 = sadd.s32 %s9, 1
    %s17 = ssub.s32 %s9, %s16
    %p18 = scmp.eq.s32.totalorder %s17, 0
    %s20 = sadd.s32 %s19, 1
    %s21 = scalar_select %p18, %s19, %s20
    %p24 = pneg %p18
    %p25 = scmp.eq.s32.totalorder %s9, 1
    %p26 = por %p24, %p25
    %p27 = scmp.ne.s32.totalorder %s19, %s22
    %p28 = scmp.eq.s32.totalorder %s9, 0
    %p29 = por %p27, %p28
    %p30 = scmp.ne.s32.totalorder %s19, %s22
    %p31 = scmp.eq.s32.totalorder %s14, 1
    %p32 = por %p30, %p31
    %p33 = scmp.ne.s32.totalorder %s22, %s23
    %p34 = scmp.eq.s32.totalorder %s14, 0
    %p35 = por %p33, %p34
    %p36 = scmp.ne.s32.totalorder %s22, %s23
    %p37 = scmp.eq.s32.totalorder %s15, 1
    %p38 = por %p36, %p37
    %p40 = scmp.ne.s32.totalorder %s23, %s39
    %p41 = scmp.eq.s32.totalorder %s15, 0
    %p42 = por %p40, %p41
    %s44 = sadd.s32 %s43, 1
    %p47 = scmp.eq.s32.totalorder %s9, 1
    %p48 = scmp.ne.s32.totalorder %s43, %s45
    %p49 = scmp.eq.s32.totalorder %s9, 0
    %p50 = por %p48, %p49
    %p51 = scmp.ne.s32.totalorder %s43, %s45
    %p52 = scmp.eq.s32.totalorder %s14, 1
    %p53 = por %p51, %p52
    %p54 = scmp.ne.s32.totalorder %s45, %s46
    %p55 = scmp.eq.s32.totalorder %s14, 0
    %p56 = por %p54, %p55
    %p57 = scmp.ne.s32.totalorder %s45, %s46
    %p58 = scmp.eq.s32.totalorder %s15, 1
    %p59 = por %p57, %p58
    %p61 = scmp.ne.s32.totalorder %s46, %s60
    %p62 = scmp.eq.s32.totalorder %s15, 0
    %p63 = por %p61, %p62
    %s65 = sadd.s32 %s64, 1
    %p68 = scmp.eq.s32.totalorder %s9, 1
    %p69 = scmp.ne.s32.totalorder %s64, %s66
    %p70 = scmp.eq.s32.totalorder %s9, 0
    %p71 = por %p69, %p70
    %p72 = scmp.ne.s32.totalorder %s64, %s66
    %p73 = scmp.eq.s32.totalorder %s14, 1
    %p74 = por %p72, %p73
    %p75 = scmp.ne.s32.totalorder %s66, %s67
    %p76 = scmp.eq.s32.totalorder %s14, 0
    %p77 = por %p75, %p76
    %p78 = scmp.ne.s32.totalorder %s66, %s67
    %p79 = scmp.eq.s32.totalorder %s15, 1
    %p80 = por %p78, %p79
    %p82 = scmp.ne.s32.totalorder %s67, %s81
    %p83 = scmp.eq.s32.totalorder %s15, 0
    %p84 = por %p82, %p83
    %s85 = ssub.s32 %s9, %s16
    %p86 = scmp.eq.s32.totalorder %s85, 0
    %s88 = sadd.s32 %s87, 1
    %s89 = scalar_select %p86, %s87, %s88
    %p92 = pneg %p86
    %p93 = scmp.eq.s32.totalorder %s9, 1
    %p94 = por %p92, %p93
    %p95 = scmp.ne.s32.totalorder %s87, %s90
    %p96 = scmp.eq.s32.totalorder %s9, 0
    %p97 = por %p95, %p96
    %p98 = scmp.ne.s32.totalorder %s87, %s90
    %p99 = scmp.eq.s32.totalorder %s14, 1
    %p100 = por %p98, %p99
    %p101 = scmp.ne.s32.totalorder %s90, %s91
    %p102 = scmp.eq.s32.totalorder %s14, 0
    %p103 = por %p101, %p102
    %p104 = scmp.ne.s32.totalorder %s90, %s91
    %p105 = scmp.eq.s32.totalorder %s15, 1
    %p106 = por %p104, %p105
    %p108 = scmp.ne.s32.totalorder %s91, %s107
    %p109 = scmp.eq.s32.totalorder %s15, 0
    %p110 = por %p108, %p109
    %p111 = scmp.le.s32.totalorder 1, %s9
    %p112 = scmp.lt.s32.totalorder %s9, 3
    %p113 = pnand %p111, %p112
    %p114 = pneg %p113
    // Predicated region
    $region9: #{tpu_custom_call.1} parent=5 // pred_check
      _
    $region10: #{tpu_custom_call.1} parent=5 // pred_check_branch
      %116 = sbr.rel (%p113) target = $region12
    $region11: #{tpu_custom_call.1} parent=5 // pred_region
      %s117 = ssub.s32 %s9, 1
      // Predicated region
      $region13: #{tpu_custom_call.1} parent=11 // pred_check
        %p118 = pneg %p56
      $region14: #{tpu_custom_call.1} parent=11 // pred_check_branch
        %120 = sbr.rel (%p118) target = $region16
      $region15: #{tpu_custom_call.1} parent=11 // pred_region
        _
      $region16: #{tpu_custom_call.1} parent=11 // pred_fallthru
        _
      // Predicated region
      $region17: #{tpu_custom_call.1} parent=11 // pred_check
        %p121 = pneg %p77
      $region18: #{tpu_custom_call.1} parent=11 // pred_check_branch
        %123 = sbr.rel (%p121) target = $region20
      $region19: #{tpu_custom_call.1} parent=11 // pred_region
        _
      $region20: #{tpu_custom_call.1} parent=11 // pred_fallthru
        _
    $region12: #{tpu_custom_call.1} parent=5 // pred_fallthru
      _
    %p124 = scmp.lt.s32.totalorder %s9, 2
    // Predicated region
    $region21: #{tpu_custom_call.1} parent=5 // pred_check
      %p125 = pneg %p124
    $region22: #{tpu_custom_call.1} parent=5 // pred_check_branch
      %127 = sbr.rel (%p125) target = $region24
    $region23: #{tpu_custom_call.1} parent=5 // pred_region
      // Predicated region
      $region25: #{tpu_custom_call.1} parent=23 // pred_check
        %p128 = pneg %p29
      $region26: #{tpu_custom_call.1} parent=23 // pred_check_branch
        %130 = sbr.rel (%p128) target = $region28
      $region27: #{tpu_custom_call.1} parent=23 // pred_region
        %s131 = smul.u32 8, %s9
        %p132 = scmp.lt.s32.totalorder %s131, 15
        %s133 = scalar_select %p132, %s131, 15
        %s134 = smul.addr %s133, 8
        %s135 = scalar_lea.vmem %s0, %s134
        %s136 = smul.u32 8, %s9
      $region28: #{tpu_custom_call.1} parent=23 // pred_fallthru
        _
    $region24: #{tpu_custom_call.1} parent=5 // pred_fallthru
      _
    %p137 = scmp.le.s32.totalorder 1, %s9
    %p138 = scmp.lt.s32.totalorder %s9, 3
    %p139 = pnand %p137, %p138
    %p140 = pneg %p139
    // Predicated region
    $region29: #{tpu_custom_call.1} parent=5 // pred_check
      _
    $region30: #{tpu_custom_call.1} parent=5 // pred_check_branch
      %142 = sbr.rel (%p139) target = $region32
    $region31: #{tpu_custom_call.1} parent=5 // pred_region
      %s143 = ssub.s32 %s9, 1
      %s144 = smul.u32 8, %s14
      %p145 = scmp.lt.s32.totalorder %s144, 15
      %s146 = scalar_select %p145, %s144, 15
      %s147 = smul.addr %s146, 8
      %s148 = scalar_lea.vmem %s0, %s147
      %p149 = pneg %p35
      %p150 = pneg %p32
      %p151 = pneg %p56
      %p152 = pneg %p53
      %p153 = pneg %p77
      %p154 = pneg %p74
      %p155 = pneg %p103
      %p156 = pneg %p100
      %s157 = smul.u32 8, %s14
      %p158 = scmp.lt.s32.totalorder %s157, 15
      %s159 = scalar_select %p158, %s157, 15
      %s160 = smul.addr %s159, 8
      %s161 = scalar_lea.vmem %s3, %s160
      %s162 = smul.u32 8, %s14
      %p163 = scmp.lt.s32.totalorder %s162, 15
      %s164 = scalar_select %p163, %s162, 15
      %s165 = smul.addr %s164, 8
      %s166 = scalar_lea.vmem %s0, %s165
      %s167 = smul.u32 8, %s14
      %s168 = smul.u32 8, %s14
      %p169 = scmp.lt.s32.totalorder %s168, 15
      %s170 = scalar_select %p169, %s168, 15
      %s171 = smul.addr %s170, 8
      %s172 = scalar_lea.vmem %s3, %s171
      %s173 = smul.u32 8, %s14
      %v174 = vld [vmem:[%s166] sm:$0xff]
      %v175 = vld [vmem:[%s166 + $0x8] sm:$0xff]
      %v176 = vld [vmem:[%s166 + $0x10] sm:$0xff]
      %v177 = vld [vmem:[%s166 + $0x18] sm:$0xff]
      %v178 = vld [vmem:[%s166 + $0x20] sm:$0xff]
      %v179 = vld [vmem:[%s166 + $0x28] sm:$0xff]
      %v180 = vld [vmem:[%s166 + $0x30] sm:$0xff]
      %v181 = vld [vmem:[%s166 + $0x38] sm:$0xff]
      %v182 = vld [vmem:[%s1] sm:$0x7]
      %v183 = vld [vmem:[%s2] sm:$0x1]
      %185 = vset.pattern.permute.xlu0 0
      %186 = vperm.xlu0 %185, %v174
      %v187 = vpop.permute.xlu0 %186
      %190 = vset.pattern.permute.xlu0 0
      %191 = vperm.xlu0 %190, %v175
      %v192 = vpop.permute.xlu0 %191
      %195 = vset.pattern.permute.xlu0 0
      %196 = vperm.xlu0 %195, %v176
      %v197 = vpop.permute.xlu0 %196
      %200 = vset.pattern.permute.xlu0 0
      %201 = vperm.xlu0 %200, %v177
      %v202 = vpop.permute.xlu0 %201
      %205 = vset.pattern.permute.xlu0 0
      %206 = vperm.xlu0 %205, %v178
      %v207 = vpop.permute.xlu0 %206
      %210 = vset.pattern.permute.xlu0 0
      %211 = vperm.xlu0 %210, %v179
      %v212 = vpop.permute.xlu0 %211
      %215 = vset.pattern.permute.xlu0 0
      %216 = vperm.xlu0 %215, %v180
      %v217 = vpop.permute.xlu0 %216
      %220 = vset.pattern.permute.xlu0 0
      %221 = vperm.xlu0 %220, %v181
      %v222 = vpop.permute.xlu0 %221
      %v224 = vperm.slane %v182, 0
      %v225 = vmul.f32 %v187, %v224
      %v226 = vmul.f32 %v192, %v224
      %v227 = vmul.f32 %v197, %v224
      %v228 = vmul.f32 %v202, %v224
      %v229 = vmul.f32 %v207, %v224
      %v230 = vmul.f32 %v212, %v224
      %v231 = vmul.f32 %v217, %v224
      %v232 = vmul.f32 %v222, %v224
      %233 = vset.pattern.permute.xlu0 1
      %234 = vperm.xlu0 %233, %v174
      %v235 = vpop.permute.xlu0 %234
      %237 = vset.pattern.permute.xlu0 1
      %238 = vperm.xlu0 %237, %v175
      %v239 = vpop.permute.xlu0 %238
      %241 = vset.pattern.permute.xlu0 1
      %242 = vperm.xlu0 %241, %v176
      %v243 = vpop.permute.xlu0 %242
      %245 = vset.pattern.permute.xlu0 1
      %246 = vperm.xlu0 %245, %v177
      %v247 = vpop.permute.xlu0 %246
      %249 = vset.pattern.permute.xlu0 1
      %250 = vperm.xlu0 %249, %v178
      %v251 = vpop.permute.xlu0 %250
      %253 = vset.pattern.permute.xlu0 1
      %254 = vperm.xlu0 %253, %v179
      %v255 = vpop.permute.xlu0 %254
      %257 = vset.pattern.permute.xlu0 1
      %258 = vperm.xlu0 %257, %v180
      %v259 = vpop.permute.xlu0 %258
      %261 = vset.pattern.permute.xlu0 1
      %262 = vperm.xlu0 %261, %v181
      %v263 = vpop.permute.xlu0 %262
      %v265 = vperm.slane %v182, 1
      %v266 = vmul.f32 %v235, %v265
      %v267 = vmul.f32 %v239, %v265
      %v268 = vmul.f32 %v243, %v265
      %v269 = vmul.f32 %v247, %v265
      %v270 = vmul.f32 %v251, %v265
      %v271 = vmul.f32 %v255, %v265
      %v272 = vmul.f32 %v259, %v265
      %v273 = vmul.f32 %v263, %v265
      %v274 = vadd.f32 %v225, %v266
      %v275 = vadd.f32 %v226, %v267
      %v276 = vadd.f32 %v227, %v268
      %v277 = vadd.f32 %v228, %v269
      %v278 = vadd.f32 %v229, %v270
      %v279 = vadd.f32 %v230, %v271
      %v280 = vadd.f32 %v231, %v272
      %v281 = vadd.f32 %v232, %v273
      %282 = vset.pattern.permute.xlu0 2
      %283 = vperm.xlu0 %282, %v174
      %v284 = vpop.permute.xlu0 %283
      %286 = vset.pattern.permute.xlu0 2
      %287 = vperm.xlu0 %286, %v175
      %v288 = vpop.permute.xlu0 %287
      %290 = vset.pattern.permute.xlu0 2
      %291 = vperm.xlu0 %290, %v176
      %v292 = vpop.permute.xlu0 %291
      %294 = vset.pattern.permute.xlu0 2
      %295 = vperm.xlu0 %294, %v177
      %v296 = vpop.permute.xlu0 %295
      %298 = vset.pattern.permute.xlu0 2
      %299 = vperm.xlu0 %298, %v178
      %v300 = vpop.permute.xlu0 %299
      %302 = vset.pattern.permute.xlu0 2
      %303 = vperm.xlu0 %302, %v179
      %v304 = vpop.permute.xlu0 %303
      %306 = vset.pattern.permute.xlu0 2
      %307 = vperm.xlu0 %306, %v180
      %v308 = vpop.permute.xlu0 %307
      %310 = vset.pattern.permute.xlu0 2
      %311 = vperm.xlu0 %310, %v181
      %v312 = vpop.permute.xlu0 %311
      %v314 = vperm.slane %v182, 2
      %v315 = vmul.f32 %v284, %v314
      %v316 = vmul.f32 %v288, %v314
      %v317 = vmul.f32 %v292, %v314
      %v318 = vmul.f32 %v296, %v314
      %v319 = vmul.f32 %v300, %v314
      %v320 = vmul.f32 %v304, %v314
      %v321 = vmul.f32 %v308, %v314
      %v322 = vmul.f32 %v312, %v314
      %v323 = vadd.f32 %v274, %v315
      %v324 = vadd.f32 %v275, %v316
      %v325 = vadd.f32 %v276, %v317
      %v326 = vadd.f32 %v277, %v318
      %v327 = vadd.f32 %v278, %v319
      %v328 = vadd.f32 %v279, %v320
      %v329 = vadd.f32 %v280, %v321
      %v330 = vadd.f32 %v281, %v322
      %v332 = vperm.slane %v183, 0
      %v334 = vadd.f32 %v323, %v332
      %v335 = vadd.f32 %v324, %v332
      %v336 = vadd.f32 %v325, %v332
      %v337 = vadd.f32 %v326, %v332
      %v338 = vadd.f32 %v327, %v332
      %v339 = vadd.f32 %v328, %v332
      %v340 = vadd.f32 %v329, %v332
      %v341 = vadd.f32 %v330, %v332
      %v342 = vand.u32 2147483647, %v334
      %vm343 = vcmp.le.f32.partialorder %v342, 0.7853982
      %vm344 = vcmp.lt.s32.totalorder %v334, 0
      %v345 = vand.u32 %v334, 2139095040
      %v346 = vshrl.u32 %v345, 23
      %v347 = vsub.s32 %v346, 127
      %v348 = vand.u32 2147483647, %v334
      %v349 = vand.u32 %v348, 8388607
      %v350 = vor.u32 %v349, 8388608
      %v351 = vsub.s32 0, %v350
      %v352 = vadd.s32 %v347, 1
      %vm353 = vcmp.gt.s32.totalorder %v352, 0
      %v354 = vsel %vm353, %v352, 0
      %v355 = vshrl.u32 %v354, 5
      %v356 = vand.u32 %v354, 31
      %v357 = vsub.s32 32, %v356
      %v358 = vshrl.u32 683565275, %v357
      %v359 = vshll.u32 683565275, %v356
      %v360 = vshrl.u32 2475754826, %v357
      %v361 = vor.u32 %v359, %v360
      %v362 = vshll.u32 2475754826, %v356
      %v363 = vshrl.u32 2131351028, %v357
      %v364 = vor.u32 %v362, %v363
      %v365 = vshll.u32 2131351028, %v356
      %v366 = vshrl.u32 2102212464, %v357
      %v367 = vor.u32 %v365, %v366
      %v368 = vshll.u32 2102212464, %v356
      %v369 = vshrl.u32 920167782, %v357
      %v370 = vor.u32 %v368, %v369
      %v371 = vshll.u32 920167782, %v356
      %v372 = vshrl.u32 1326507024, %v357
      %v373 = vor.u32 %v371, %v372
      %vm374 = vcmp.lt.s32.totalorder %v355, 1
      %vm375 = vcmp.lt.s32.totalorder %v355, 2
      %vm376 = vcmp.lt.s32.totalorder %v355, 3
      %vm377 = vcmp.lt.s32.totalorder %v355, 4
      %v378 = vsel %vm374, %v358, %v361
      %v379 = vsel %vm377, %v367, 2102212464
      %v380 = vsel %vm376, %v364, %v379
      %v381 = vsel %vm375, %v378, %v380
      %v382 = vsel %vm374, %v361, %v364
      %v383 = vsel %vm377, %v370, 920167782
      %v384 = vsel %vm376, %v367, %v383
      %v385 = vsel %vm375, %v382, %v384
      %v386 = vsel %vm374, %v364, %v367
      %v387 = vsel %vm377, %v373, 1326507024
      %v388 = vsel %vm376, %v370, %v387
      %v389 = vsel %vm375, %v386, %v388
      %v390 = vshll.u32 %v350, 8
      %v391 = vand.u32 %v390, 65535
      %v392 = vshrl.u32 %v390, 16
      %v393 = vand.u32 %v389, 65535
      %v394 = vshrl.u32 %v389, 16
      %v395 = vmul.u32 %v391, %v393
      %v396 = vmul.u32 %v391, %v394
      %v397 = vmul.u32 %v392, %v393
      %v398 = vmul.u32 %v392, %v394
      %v399 = vshll.u32 %v396, 16
      %v400 = vshrl.u32 %v396, 16
      %v401 = vshll.u32 %v397, 16
      %v402 = vshrl.u32 %v397, 16
      %vm403 = vc.u32 %v395, %v399
      %v404 = vsel %vm403, 1, 0
      %v405 = vadd.s32 %v395, %v399
      %v406 = vadd.s32 %v398, %v404
      %vm407 = vc.u32 %v405, %v401
      %v408 = vsel %vm407, 1, 0
      %v409 = vadd.s32 %v405, %v401
      %v410 = vadd.s32 %v406, %v408
      %v411 = vadd.s32 %v410, %v400
      %v412 = vadd.s32 %v411, %v402
      %v413 = vand.u32 %v390, 65535
      %v414 = vshrl.u32 %v390, 16
      %v415 = vand.u32 %v385, 65535
      %v416 = vshrl.u32 %v385, 16
      %v417 = vmul.u32 %v413, %v415
      %v418 = vmul.u32 %v413, %v416
      %v419 = vmul.u32 %v414, %v415
      %v420 = vmul.u32 %v414, %v416
      %v421 = vshll.u32 %v418, 16
      %v422 = vshrl.u32 %v418, 16
      %v423 = vshll.u32 %v419, 16
      %v424 = vshrl.u32 %v419, 16
      %vm425 = vc.u32 %v417, %v421
      %v426 = vsel %vm425, 1, 0
      %v427 = vadd.s32 %v417, %v421
      %v428 = vadd.s32 %v420, %v426
      %vm429 = vc.u32 %v427, %v423
      %v430 = vsel %vm429, 1, 0
      %v431 = vadd.s32 %v427, %v423
      %v432 = vadd.s32 %v428, %v430
      %v433 = vadd.s32 %v432, %v422
      %v434 = vadd.s32 %v433, %v424
      %v435 = vmul.u32 %v390, %v381
      %v436 = vadd.s32 %v412, %v431
      %vm437 = vc.u32 %v412, %v431
      %v438 = vadd.s32 %v434, 1
      %v439 = vsel %vm437, %v438, %v434
      %v440 = vadd.s32 %v435, %v439
      %v441 = vadd.s32 %v440, 536870912
      %v442 = vshrl.u32 %v441, 30
      %v443 = vshll.u32 %v442, 30
      %v444 = vsub.s32 %v440, %v443
      %vm445 = vcmp.lt.s32.totalorder %v444, 0
      %v446 = vsub.s32 0, %v444
      %v447 = vsel %vm445, %v446, %v444
      %v448 = vclz %v447
      %v449 = vsub.s32 %v448, 2
      %vm450 = vcmp.gt.s32.totalorder 0, %v449
      %v451 = vsel %vm450, 0, %v449
      %v452 = vsub.s32 32, %v451
      %v453 = vshll.u32 %v444, %v451
      %v454 = vshrl.u32 %v436, %v452
      %v455 = vor.u32 %v453, %v454
      %v456 = vsub.s32 4294967266, %v451
      %v457 = vadd.s32 %v456, 127
      %v458 = vshll.u32 %v457, 23
      %v459 = vor.u32 4788187, %v458
      %v460 = vand.u32 2147483647, %v459
      %v462 = vcvt.s32.f32 %v455
      %v463 = vmul.f32 %v462, %v460
      %v464 = vxor.u32 %v463, 2147483648
      %v465 = vsel %vm344, %v464, %v463
      %v466 = vsub.s32 4, %v442
      %v467 = vsel %vm344, %v466, %v442
      %v468 = vsel %vm343, %v334, %v465
      %v469 = vsel %vm343, 0, %v467
      %v470 = vmul.f32 %v468, %v468
      %v471 = vmul.f32 %v470, -0.001358992
      %v472 = vadd.f32 %v471, 0.041655596
      %v473 = vmul.f32 %v470, %v472
      %v474 = vadd.f32 %v473, -0.4999988
      %v475 = vmul.f32 %v470, %v474
      %v476 = vadd.f32 1.0, %v475
      %v477 = vmul.f32 %v468, %v468
      %v478 = vmul.f32 %v477, -0.00019511016
      %v479 = vadd.f32 %v478, 0.008332121
      %v480 = vmul.f32 %v477, %v479
      %v481 = vadd.f32 %v480, -0.16666654
      %v482 = vmul.f32 %v477, %v481
      %v483 = vadd.f32 %v482, 1.0
      %v484 = vmul.f32 %v483, %v468
      %vm485 = vweird.f32 %v334
      %v486 = vadd.s32 %v469, 3
      %v487 = vand.u32 %v486, 3
      %vm488 = vcmp.lt.s32.totalorder %v487, 2
      %vm489 = vcmp.eq.s32.totalorder %v487, 0
      %v490 = vxor.u32 %v484, 2147483648
      %v491 = vsel %vm489, %v476, %v490
      %vm492 = vcmp.eq.s32.totalorder %v487, 2
      %v493 = vxor.u32 %v476, 2147483648
      %v494 = vsel %vm492, %v493, %v484
      %v495 = vsel %vm488, %v491, %v494
      %v496 = vsel %vm485, nan, %v495
      %v497 = vand.u32 2147483647, %v335
      %vm498 = vcmp.le.f32.partialorder %v497, 0.7853982
      %vm499 = vcmp.lt.s32.totalorder %v335, 0
      %v500 = vand.u32 %v335, 2139095040
      %v501 = vshrl.u32 %v500, 23
      %v502 = vsub.s32 %v501, 127
      %v503 = vand.u32 2147483647, %v335
      %v504 = vand.u32 %v503, 8388607
      %v505 = vor.u32 %v504, 8388608
      %v506 = vsub.s32 0, %v505
      %v507 = vadd.s32 %v502, 1
      %vm508 = vcmp.gt.s32.totalorder %v507, 0
      %v509 = vsel %vm508, %v507, 0
      %v510 = vshrl.u32 %v509, 5
      %v511 = vand.u32 %v509, 31
      %v512 = vsub.s32 32, %v511
      %v513 = vshrl.u32 683565275, %v512
      %v514 = vshll.u32 683565275, %v511
      %v515 = vshrl.u32 2475754826, %v512
      %v516 = vor.u32 %v514, %v515
      %v517 = vshll.u32 2475754826, %v511
      %v518 = vshrl.u32 2131351028, %v512
      %v519 = vor.u32 %v517, %v518
      %v520 = vshll.u32 2131351028, %v511
      %v521 = vshrl.u32 2102212464, %v512
      %v522 = vor.u32 %v520, %v521
      %v523 = vshll.u32 2102212464, %v511
      %v524 = vshrl.u32 920167782, %v512
      %v525 = vor.u32 %v523, %v524
      %v526 = vshll.u32 920167782, %v511
      %v527 = vshrl.u32 1326507024, %v512
      %v528 = vor.u32 %v526, %v527
      %vm529 = vcmp.lt.s32.totalorder %v510, 1
      %vm530 = vcmp.lt.s32.totalorder %v510, 2
      %vm531 = vcmp.lt.s32.totalorder %v510, 3
      %vm532 = vcmp.lt.s32.totalorder %v510, 4
      %v533 = vsel %vm529, %v513, %v516
      %v534 = vsel %vm532, %v522, 2102212464
      %v535 = vsel %vm531, %v519, %v534
      %v536 = vsel %vm530, %v533, %v535
      %v537 = vsel %vm529, %v516, %v519
      %v538 = vsel %vm532, %v525, 920167782
      %v539 = vsel %vm531, %v522, %v538
      %v540 = vsel %vm530, %v537, %v539
      %v541 = vsel %vm529, %v519, %v522
      %v542 = vsel %vm532, %v528, 1326507024
      %v543 = vsel %vm531, %v525, %v542
      %v544 = vsel %vm530, %v541, %v543
      %v545 = vshll.u32 %v505, 8
      %v546 = vand.u32 %v545, 65535
      %v547 = vshrl.u32 %v545, 16
      %v548 = vand.u32 %v544, 65535
      %v549 = vshrl.u32 %v544, 16
      %v550 = vmul.u32 %v546, %v548
      %v551 = vmul.u32 %v546, %v549
      %v552 = vmul.u32 %v547, %v548
      %v553 = vmul.u32 %v547, %v549
      %v554 = vshll.u32 %v551, 16
      %v555 = vshrl.u32 %v551, 16
      %v556 = vshll.u32 %v552, 16
      %v557 = vshrl.u32 %v552, 16
      %vm558 = vc.u32 %v550, %v554
      %v559 = vsel %vm558, 1, 0
      %v560 = vadd.s32 %v550, %v554
      %v561 = vadd.s32 %v553, %v559
      %vm562 = vc.u32 %v560, %v556
      %v563 = vsel %vm562, 1, 0
      %v564 = vadd.s32 %v560, %v556
      %v565 = vadd.s32 %v561, %v563
      %v566 = vadd.s32 %v565, %v555
      %v567 = vadd.s32 %v566, %v557
      %v568 = vand.u32 %v545, 65535
      %v569 = vshrl.u32 %v545, 16
      %v570 = vand.u32 %v540, 65535
      %v571 = vshrl.u32 %v540, 16
      %v572 = vmul.u32 %v568, %v570
      %v573 = vmul.u32 %v568, %v571
      %v574 = vmul.u32 %v569, %v570
      %v575 = vmul.u32 %v569, %v571
      %v576 = vshll.u32 %v573, 16
      %v577 = vshrl.u32 %v573, 16
      %v578 = vshll.u32 %v574, 16
      %v579 = vshrl.u32 %v574, 16
      %vm580 = vc.u32 %v572, %v576
      %v581 = vsel %vm580, 1, 0
      %v582 = vadd.s32 %v572, %v576
      %v583 = vadd.s32 %v575, %v581
      %vm584 = vc.u32 %v582, %v578
      %v585 = vsel %vm584, 1, 0
      %v586 = vadd.s32 %v582, %v578
      %v587 = vadd.s32 %v583, %v585
      %v588 = vadd.s32 %v587, %v577
      %v589 = vadd.s32 %v588, %v579
      %v590 = vmul.u32 %v545, %v536
      %v591 = vadd.s32 %v567, %v586
      %vm592 = vc.u32 %v567, %v586
      %v593 = vadd.s32 %v589, 1
      %v594 = vsel %vm592, %v593, %v589
      %v595 = vadd.s32 %v590, %v594
      %v596 = vadd.s32 %v595, 536870912
      %v597 = vshrl.u32 %v596, 30
      %v598 = vshll.u32 %v597, 30
      %v599 = vsub.s32 %v595, %v598
      %vm600 = vcmp.lt.s32.totalorder %v599, 0
      %v601 = vsub.s32 0, %v599
      %v602 = vsel %vm600, %v601, %v599
      %v603 = vclz %v602
      %v604 = vsub.s32 %v603, 2
      %vm605 = vcmp.gt.s32.totalorder 0, %v604
      %v606 = vsel %vm605, 0, %v604
      %v607 = vsub.s32 32, %v606
      %v608 = vshll.u32 %v599, %v606
      %v609 = vshrl.u32 %v591, %v607
      %v610 = vor.u32 %v608, %v609
      %v611 = vsub.s32 4294967266, %v606
      %v612 = vadd.s32 %v611, 127
      %v613 = vshll.u32 %v612, 23
      %v614 = vor.u32 4788187, %v613
      %v615 = vand.u32 2147483647, %v614
      %v617 = vcvt.s32.f32 %v610
      %v618 = vmul.f32 %v617, %v615
      %v619 = vxor.u32 %v618, 2147483648
      %v620 = vsel %vm499, %v619, %v618
      %v621 = vsub.s32 4, %v597
      %v622 = vsel %vm499, %v621, %v597
      %v623 = vsel %vm498, %v335, %v620
      %v624 = vsel %vm498, 0, %v622
      %v625 = vmul.f32 %v623, %v623
      %v626 = vmul.f32 %v625, -0.001358992
      %v627 = vadd.f32 %v626, 0.041655596
      %v628 = vmul.f32 %v625, %v627
      %v629 = vadd.f32 %v628, -0.4999988
      %v630 = vmul.f32 %v625, %v629
      %v631 = vadd.f32 1.0, %v630
      %v632 = vmul.f32 %v623, %v623
      %v633 = vmul.f32 %v632, -0.00019511016
      %v634 = vadd.f32 %v633, 0.008332121
      %v635 = vmul.f32 %v632, %v634
      %v636 = vadd.f32 %v635, -0.16666654
      %v637 = vmul.f32 %v632, %v636
      %v638 = vadd.f32 %v637, 1.0
      %v639 = vmul.f32 %v638, %v623
      %vm640 = vweird.f32 %v335
      %v641 = vadd.s32 %v624, 3
      %v642 = vand.u32 %v641, 3
      %vm643 = vcmp.lt.s32.totalorder %v642, 2
      %vm644 = vcmp.eq.s32.totalorder %v642, 0
      %v645 = vxor.u32 %v639, 2147483648
      %v646 = vsel %vm644, %v631, %v645
      %vm647 = vcmp.eq.s32.totalorder %v642, 2
      %v648 = vxor.u32 %v631, 2147483648
      %v649 = vsel %vm647, %v648, %v639
      %v650 = vsel %vm643, %v646, %v649
      %v651 = vsel %vm640, nan, %v650
      %v652 = vand.u32 2147483647, %v336
      %vm653 = vcmp.le.f32.partialorder %v652, 0.7853982
      %vm654 = vcmp.lt.s32.totalorder %v336, 0
      %v655 = vand.u32 %v336, 2139095040
      %v656 = vshrl.u32 %v655, 23
      %v657 = vsub.s32 %v656, 127
      %v658 = vand.u32 2147483647, %v336
      %v659 = vand.u32 %v658, 8388607
      %v660 = vor.u32 %v659, 8388608
      %v661 = vsub.s32 0, %v660
      %v662 = vadd.s32 %v657, 1
      %vm663 = vcmp.gt.s32.totalorder %v662, 0
      %v664 = vsel %vm663, %v662, 0
      %v665 = vshrl.u32 %v664, 5
      %v666 = vand.u32 %v664, 31
      %v667 = vsub.s32 32, %v666
      %v668 = vshrl.u32 683565275, %v667
      %v669 = vshll.u32 683565275, %v666
      %v670 = vshrl.u32 2475754826, %v667
      %v671 = vor.u32 %v669, %v670
      %v672 = vshll.u32 2475754826, %v666
      %v673 = vshrl.u32 2131351028, %v667
      %v674 = vor.u32 %v672, %v673
      %v675 = vshll.u32 2131351028, %v666
      %v676 = vshrl.u32 2102212464, %v667
      %v677 = vor.u32 %v675, %v676
      %v678 = vshll.u32 2102212464, %v666
      %v679 = vshrl.u32 920167782, %v667
      %v680 = vor.u32 %v678, %v679
      %v681 = vshll.u32 920167782, %v666
      %v682 = vshrl.u32 1326507024, %v667
      %v683 = vor.u32 %v681, %v682
      %vm684 = vcmp.lt.s32.totalorder %v665, 1
      %vm685 = vcmp.lt.s32.totalorder %v665, 2
      %vm686 = vcmp.lt.s32.totalorder %v665, 3
      %vm687 = vcmp.lt.s32.totalorder %v665, 4
      %v688 = vsel %vm684, %v668, %v671
      %v689 = vsel %vm687, %v677, 2102212464
      %v690 = vsel %vm686, %v674, %v689
      %v691 = vsel %vm685, %v688, %v690
      %v692 = vsel %vm684, %v671, %v674
      %v693 = vsel %vm687, %v680, 920167782
      %v694 = vsel %vm686, %v677, %v693
      %v695 = vsel %vm685, %v692, %v694
      %v696 = vsel %vm684, %v674, %v677
      %v697 = vsel %vm687, %v683, 1326507024
      %v698 = vsel %vm686, %v680, %v697
      %v699 = vsel %vm685, %v696, %v698
      %v700 = vshll.u32 %v660, 8
      %v701 = vand.u32 %v700, 65535
      %v702 = vshrl.u32 %v700, 16
      %v703 = vand.u32 %v699, 65535
      %v704 = vshrl.u32 %v699, 16
      %v705 = vmul.u32 %v701, %v703
      %v706 = vmul.u32 %v701, %v704
      %v707 = vmul.u32 %v702, %v703
      %v708 = vmul.u32 %v702, %v704
      %v709 = vshll.u32 %v706, 16
      %v710 = vshrl.u32 %v706, 16
      %v711 = vshll.u32 %v707, 16
      %v712 = vshrl.u32 %v707, 16
      %vm713 = vc.u32 %v705, %v709
      %v714 = vsel %vm713, 1, 0
      %v715 = vadd.s32 %v705, %v709
      %v716 = vadd.s32 %v708, %v714
      %vm717 = vc.u32 %v715, %v711
      %v718 = vsel %vm717, 1, 0
      %v719 = vadd.s32 %v715, %v711
      %v720 = vadd.s32 %v716, %v718
      %v721 = vadd.s32 %v720, %v710
      %v722 = vadd.s32 %v721, %v712
      %v723 = vand.u32 %v700, 65535
      %v724 = vshrl.u32 %v700, 16
      %v725 = vand.u32 %v695, 65535
      %v726 = vshrl.u32 %v695, 16
      %v727 = vmul.u32 %v723, %v725
      %v728 = vmul.u32 %v723, %v726
      %v729 = vmul.u32 %v724, %v725
      %v730 = vmul.u32 %v724, %v726
      %v731 = vshll.u32 %v728, 16
      %v732 = vshrl.u32 %v728, 16
      %v733 = vshll.u32 %v729, 16
      %v734 = vshrl.u32 %v729, 16
      %vm735 = vc.u32 %v727, %v731
      %v736 = vsel %vm735, 1, 0
      %v737 = vadd.s32 %v727, %v731
      %v738 = vadd.s32 %v730, %v736
      %vm739 = vc.u32 %v737, %v733
      %v740 = vsel %vm739, 1, 0
      %v741 = vadd.s32 %v737, %v733
      %v742 = vadd.s32 %v738, %v740
      %v743 = vadd.s32 %v742, %v732
      %v744 = vadd.s32 %v743, %v734
      %v745 = vmul.u32 %v700, %v691
      %v746 = vadd.s32 %v722, %v741
      %vm747 = vc.u32 %v722, %v741
      %v748 = vadd.s32 %v744, 1
      %v749 = vsel %vm747, %v748, %v744
      %v750 = vadd.s32 %v745, %v749
      %v751 = vadd.s32 %v750, 536870912
      %v752 = vshrl.u32 %v751, 30
      %v753 = vshll.u32 %v752, 30
      %v754 = vsub.s32 %v750, %v753
      %vm755 = vcmp.lt.s32.totalorder %v754, 0
      %v756 = vsub.s32 0, %v754
      %v757 = vsel %vm755, %v756, %v754
      %v758 = vclz %v757
      %v759 = vsub.s32 %v758, 2
      %vm760 = vcmp.gt.s32.totalorder 0, %v759
      %v761 = vsel %vm760, 0, %v759
      %v762 = vsub.s32 32, %v761
      %v763 = vshll.u32 %v754, %v761
      %v764 = vshrl.u32 %v746, %v762
      %v765 = vor.u32 %v763, %v764
      %v766 = vsub.s32 4294967266, %v761
      %v767 = vadd.s32 %v766, 127
      %v768 = vshll.u32 %v767, 23
      %v769 = vor.u32 4788187, %v768
      %v770 = vand.u32 2147483647, %v769
      %v772 = vcvt.s32.f32 %v765
      %v773 = vmul.f32 %v772, %v770
      %v774 = vxor.u32 %v773, 2147483648
      %v775 = vsel %vm654, %v774, %v773
      %v776 = vsub.s32 4, %v752
      %v777 = vsel %vm654, %v776, %v752
      %v778 = vsel %vm653, %v336, %v775
      %v779 = vsel %vm653, 0, %v777
      %v780 = vmul.f32 %v778, %v778
      %v781 = vmul.f32 %v780, -0.001358992
      %v782 = vadd.f32 %v781, 0.041655596
      %v783 = vmul.f32 %v780, %v782
      %v784 = vadd.f32 %v783, -0.4999988
      %v785 = vmul.f32 %v780, %v784
      %v786 = vadd.f32 1.0, %v785
      %v787 = vmul.f32 %v778, %v778
      %v788 = vmul.f32 %v787, -0.00019511016
      %v789 = vadd.f32 %v788, 0.008332121
      %v790 = vmul.f32 %v787, %v789
      %v791 = vadd.f32 %v790, -0.16666654
      %v792 = vmul.f32 %v787, %v791
      %v793 = vadd.f32 %v792, 1.0
      %v794 = vmul.f32 %v793, %v778
      %vm795 = vweird.f32 %v336
      %v796 = vadd.s32 %v779, 3
      %v797 = vand.u32 %v796, 3
      %vm798 = vcmp.lt.s32.totalorder %v797, 2
      %vm799 = vcmp.eq.s32.totalorder %v797, 0
      %v800 = vxor.u32 %v794, 2147483648
      %v801 = vsel %vm799, %v786, %v800
      %vm802 = vcmp.eq.s32.totalorder %v797, 2
      %v803 = vxor.u32 %v786, 2147483648
      %v804 = vsel %vm802, %v803, %v794
      %v805 = vsel %vm798, %v801, %v804
      %v806 = vsel %vm795, nan, %v805
      %v807 = vand.u32 2147483647, %v337
      %vm808 = vcmp.le.f32.partialorder %v807, 0.7853982
      %vm809 = vcmp.lt.s32.totalorder %v337, 0
      %v810 = vand.u32 %v337, 2139095040
      %v811 = vshrl.u32 %v810, 23
      %v812 = vsub.s32 %v811, 127
      %v813 = vand.u32 2147483647, %v337
      %v814 = vand.u32 %v813, 8388607
      %v815 = vor.u32 %v814, 8388608
      %v816 = vsub.s32 0, %v815
      %v817 = vadd.s32 %v812, 1
      %vm818 = vcmp.gt.s32.totalorder %v817, 0
      %v819 = vsel %vm818, %v817, 0
      %v820 = vshrl.u32 %v819, 5
      %v821 = vand.u32 %v819, 31
      %v822 = vsub.s32 32, %v821
      %v823 = vshrl.u32 683565275, %v822
      %v824 = vshll.u32 683565275, %v821
      %v825 = vshrl.u32 2475754826, %v822
      %v826 = vor.u32 %v824, %v825
      %v827 = vshll.u32 2475754826, %v821
      %v828 = vshrl.u32 2131351028, %v822
      %v829 = vor.u32 %v827, %v828
      %v830 = vshll.u32 2131351028, %v821
      %v831 = vshrl.u32 2102212464, %v822
      %v832 = vor.u32 %v830, %v831
      %v833 = vshll.u32 2102212464, %v821
      %v834 = vshrl.u32 920167782, %v822
      %v835 = vor.u32 %v833, %v834
      %v836 = vshll.u32 920167782, %v821
      %v837 = vshrl.u32 1326507024, %v822
      %v838 = vor.u32 %v836, %v837
      %vm839 = vcmp.lt.s32.totalorder %v820, 1
      %vm840 = vcmp.lt.s32.totalorder %v820, 2
      %vm841 = vcmp.lt.s32.totalorder %v820, 3
      %vm842 = vcmp.lt.s32.totalorder %v820, 4
      %v843 = vsel %vm839, %v823, %v826
      %v844 = vsel %vm842, %v832, 2102212464
      %v845 = vsel %vm841, %v829, %v844
      %v846 = vsel %vm840, %v843, %v845
      %v847 = vsel %vm839, %v826, %v829
      %v848 = vsel %vm842, %v835, 920167782
      %v849 = vsel %vm841, %v832, %v848
      %v850 = vsel %vm840, %v847, %v849
      %v851 = vsel %vm839, %v829, %v832
      %v852 = vsel %vm842, %v838, 1326507024
      %v853 = vsel %vm841, %v835, %v852
      %v854 = vsel %vm840, %v851, %v853
      %v855 = vshll.u32 %v815, 8
      %v856 = vand.u32 %v855, 65535
      %v857 = vshrl.u32 %v855, 16
      %v858 = vand.u32 %v854, 65535
      %v859 = vshrl.u32 %v854, 16
      %v860 = vmul.u32 %v856, %v858
      %v861 = vmul.u32 %v856, %v859
      %v862 = vmul.u32 %v857, %v858
      %v863 = vmul.u32 %v857, %v859
      %v864 = vshll.u32 %v861, 16
      %v865 = vshrl.u32 %v861, 16
      %v866 = vshll.u32 %v862, 16
      %v867 = vshrl.u32 %v862, 16
      %vm868 = vc.u32 %v860, %v864
      %v869 = vsel %vm868, 1, 0
      %v870 = vadd.s32 %v860, %v864
      %v871 = vadd.s32 %v863, %v869
      %vm872 = vc.u32 %v870, %v866
      %v873 = vsel %vm872, 1, 0
      %v874 = vadd.s32 %v870, %v866
      %v875 = vadd.s32 %v871, %v873
      %v876 = vadd.s32 %v875, %v865
      %v877 = vadd.s32 %v876, %v867
      %v878 = vand.u32 %v855, 65535
      %v879 = vshrl.u32 %v855, 16
      %v880 = vand.u32 %v850, 65535
      %v881 = vshrl.u32 %v850, 16
      %v882 = vmul.u32 %v878, %v880
      %v883 = vmul.u32 %v878, %v881
      %v884 = vmul.u32 %v879, %v880
      %v885 = vmul.u32 %v879, %v881
      %v886 = vshll.u32 %v883, 16
      %v887 = vshrl.u32 %v883, 16
      %v888 = vshll.u32 %v884, 16
      %v889 = vshrl.u32 %v884, 16
      %vm890 = vc.u32 %v882, %v886
      %v891 = vsel %vm890, 1, 0
      %v892 = vadd.s32 %v882, %v886
      %v893 = vadd.s32 %v885, %v891
      %vm894 = vc.u32 %v892, %v888
      %v895 = vsel %vm894, 1, 0
      %v896 = vadd.s32 %v892, %v888
      %v897 = vadd.s32 %v893, %v895
      %v898 = vadd.s32 %v897, %v887
      %v899 = vadd.s32 %v898, %v889
      %v900 = vmul.u32 %v855, %v846
      %v901 = vadd.s32 %v877, %v896
      %vm902 = vc.u32 %v877, %v896
      %v903 = vadd.s32 %v899, 1
      %v904 = vsel %vm902, %v903, %v899
      %v905 = vadd.s32 %v900, %v904
      %v906 = vadd.s32 %v905, 536870912
      %v907 = vshrl.u32 %v906, 30
      %v908 = vshll.u32 %v907, 30
      %v909 = vsub.s32 %v905, %v908
      %vm910 = vcmp.lt.s32.totalorder %v909, 0
      %v911 = vsub.s32 0, %v909
      %v912 = vsel %vm910, %v911, %v909
      %v913 = vclz %v912
      %v914 = vsub.s32 %v913, 2
      %vm915 = vcmp.gt.s32.totalorder 0, %v914
      %v916 = vsel %vm915, 0, %v914
      %v917 = vsub.s32 32, %v916
      %v918 = vshll.u32 %v909, %v916
      %v919 = vshrl.u32 %v901, %v917
      %v920 = vor.u32 %v918, %v919
      %v921 = vsub.s32 4294967266, %v916
      %v922 = vadd.s32 %v921, 127
      %v923 = vshll.u32 %v922, 23
      %v924 = vor.u32 4788187, %v923
      %v925 = vand.u32 2147483647, %v924
      %v927 = vcvt.s32.f32 %v920
      %v928 = vmul.f32 %v927, %v925
      %v929 = vxor.u32 %v928, 2147483648
      %v930 = vsel %vm809, %v929, %v928
      %v931 = vsub.s32 4, %v907
      %v932 = vsel %vm809, %v931, %v907
      %v933 = vsel %vm808, %v337, %v930
      %v934 = vsel %vm808, 0, %v932
      %v935 = vmul.f32 %v933, %v933
      %v936 = vmul.f32 %v935, -0.001358992
      %v937 = vadd.f32 %v936, 0.041655596
      %v938 = vmul.f32 %v935, %v937
      %v939 = vadd.f32 %v938, -0.4999988
      %v940 = vmul.f32 %v935, %v939
      %v941 = vadd.f32 1.0, %v940
      %v942 = vmul.f32 %v933, %v933
      %v943 = vmul.f32 %v942, -0.00019511016
      %v944 = vadd.f32 %v943, 0.008332121
      %v945 = vmul.f32 %v942, %v944
      %v946 = vadd.f32 %v945, -0.16666654
      %v947 = vmul.f32 %v942, %v946
      %v948 = vadd.f32 %v947, 1.0
      %v949 = vmul.f32 %v948, %v933
      %vm950 = vweird.f32 %v337
      %v951 = vadd.s32 %v934, 3
      %v952 = vand.u32 %v951, 3
      %vm953 = vcmp.lt.s32.totalorder %v952, 2
      %vm954 = vcmp.eq.s32.totalorder %v952, 0
      %v955 = vxor.u32 %v949, 2147483648
      %v956 = vsel %vm954, %v941, %v955
      %vm957 = vcmp.eq.s32.totalorder %v952, 2
      %v958 = vxor.u32 %v941, 2147483648
      %v959 = vsel %vm957, %v958, %v949
      %v960 = vsel %vm953, %v956, %v959
      %v961 = vsel %vm950, nan, %v960
      %v962 = vand.u32 2147483647, %v338
      %vm963 = vcmp.le.f32.partialorder %v962, 0.7853982
      %vm964 = vcmp.lt.s32.totalorder %v338, 0
      %v965 = vand.u32 %v338, 2139095040
      %v966 = vshrl.u32 %v965, 23
      %v967 = vsub.s32 %v966, 127
      %v968 = vand.u32 2147483647, %v338
      %v969 = vand.u32 %v968, 8388607
      %v970 = vor.u32 %v969, 8388608
      %v971 = vsub.s32 0, %v970
      %v972 = vadd.s32 %v967, 1
      %vm973 = vcmp.gt.s32.totalorder %v972, 0
      %v974 = vsel %vm973, %v972, 0
      %v975 = vshrl.u32 %v974, 5
      %v976 = vand.u32 %v974, 31
      %v977 = vsub.s32 32, %v976
      %v978 = vshrl.u32 683565275, %v977
      %v979 = vshll.u32 683565275, %v976
      %v980 = vshrl.u32 2475754826, %v977
      %v981 = vor.u32 %v979, %v980
      %v982 = vshll.u32 2475754826, %v976
      %v983 = vshrl.u32 2131351028, %v977
      %v984 = vor.u32 %v982, %v983
      %v985 = vshll.u32 2131351028, %v976
      %v986 = vshrl.u32 2102212464, %v977
      %v987 = vor.u32 %v985, %v986
      %v988 = vshll.u32 2102212464, %v976
      %v989 = vshrl.u32 920167782, %v977
      %v990 = vor.u32 %v988, %v989
      %v991 = vshll.u32 920167782, %v976
      %v992 = vshrl.u32 1326507024, %v977
      %v993 = vor.u32 %v991, %v992
      %vm994 = vcmp.lt.s32.totalorder %v975, 1
      %vm995 = vcmp.lt.s32.totalorder %v975, 2
      %vm996 = vcmp.lt.s32.totalorder %v975, 3
      %vm997 = vcmp.lt.s32.totalorder %v975, 4
      %v998 = vsel %vm994, %v978, %v981
      %v999 = vsel %vm997, %v987, 2102212464
      %v1000 = vsel %vm996, %v984, %v999
      %v1001 = vsel %vm995, %v998, %v1000
      %v1002 = vsel %vm994, %v981, %v984
      %v1003 = vsel %vm997, %v990, 920167782
      %v1004 = vsel %vm996, %v987, %v1003
      %v1005 = vsel %vm995, %v1002, %v1004
      %v1006 = vsel %vm994, %v984, %v987
      %v1007 = vsel %vm997, %v993, 1326507024
      %v1008 = vsel %vm996, %v990, %v1007
      %v1009 = vsel %vm995, %v1006, %v1008
      %v1010 = vshll.u32 %v970, 8
      %v1011 = vand.u32 %v1010, 65535
      %v1012 = vshrl.u32 %v1010, 16
      %v1013 = vand.u32 %v1009, 65535
      %v1014 = vshrl.u32 %v1009, 16
      %v1015 = vmul.u32 %v1011, %v1013
      %v1016 = vmul.u32 %v1011, %v1014
      %v1017 = vmul.u32 %v1012, %v1013
      %v1018 = vmul.u32 %v1012, %v1014
      %v1019 = vshll.u32 %v1016, 16
      %v1020 = vshrl.u32 %v1016, 16
      %v1021 = vshll.u32 %v1017, 16
      %v1022 = vshrl.u32 %v1017, 16
      %vm1023 = vc.u32 %v1015, %v1019
      %v1024 = vsel %vm1023, 1, 0
      %v1025 = vadd.s32 %v1015, %v1019
      %v1026 = vadd.s32 %v1018, %v1024
      %vm1027 = vc.u32 %v1025, %v1021
      %v1028 = vsel %vm1027, 1, 0
      %v1029 = vadd.s32 %v1025, %v1021
      %v1030 = vadd.s32 %v1026, %v1028
      %v1031 = vadd.s32 %v1030, %v1020
      %v1032 = vadd.s32 %v1031, %v1022
      %v1033 = vand.u32 %v1010, 65535
      %v1034 = vshrl.u32 %v1010, 16
      %v1035 = vand.u32 %v1005, 65535
      %v1036 = vshrl.u32 %v1005, 16
      %v1037 = vmul.u32 %v1033, %v1035
      %v1038 = vmul.u32 %v1033, %v1036
      %v1039 = vmul.u32 %v1034, %v1035
      %v1040 = vmul.u32 %v1034, %v1036
      %v1041 = vshll.u32 %v1038, 16
      %v1042 = vshrl.u32 %v1038, 16
      %v1043 = vshll.u32 %v1039, 16
      %v1044 = vshrl.u32 %v1039, 16
      %vm1045 = vc.u32 %v1037, %v1041
      %v1046 = vsel %vm1045, 1, 0
      %v1047 = vadd.s32 %v1037, %v1041
      %v1048 = vadd.s32 %v1040, %v1046
      %vm1049 = vc.u32 %v1047, %v1043
      %v1050 = vsel %vm1049, 1, 0
      %v1051 = vadd.s32 %v1047, %v1043
      %v1052 = vadd.s32 %v1048, %v1050
      %v1053 = vadd.s32 %v1052, %v1042
      %v1054 = vadd.s32 %v1053, %v1044
      %v1055 = vmul.u32 %v1010, %v1001
      %v1056 = vadd.s32 %v1032, %v1051
      %vm1057 = vc.u32 %v1032, %v1051
      %v1058 = vadd.s32 %v1054, 1
      %v1059 = vsel %vm1057, %v1058, %v1054
      %v1060 = vadd.s32 %v1055, %v1059
      %v1061 = vadd.s32 %v1060, 536870912
      %v1062 = vshrl.u32 %v1061, 30
      %v1063 = vshll.u32 %v1062, 30
      %v1064 = vsub.s32 %v1060, %v1063
      %vm1065 = vcmp.lt.s32.totalorder %v1064, 0
      %v1066 = vsub.s32 0, %v1064
      %v1067 = vsel %vm1065, %v1066, %v1064
      %v1068 = vclz %v1067
      %v1069 = vsub.s32 %v1068, 2
      %vm1070 = vcmp.gt.s32.totalorder 0, %v1069
      %v1071 = vsel %vm1070, 0, %v1069
      %v1072 = vsub.s32 32, %v1071
      %v1073 = vshll.u32 %v1064, %v1071
      %v1074 = vshrl.u32 %v1056, %v1072
      %v1075 = vor.u32 %v1073, %v1074
      %v1076 = vsub.s32 4294967266, %v1071
      %v1077 = vadd.s32 %v1076, 127
      %v1078 = vshll.u32 %v1077, 23
      %v1079 = vor.u32 4788187, %v1078
      %v1080 = vand.u32 2147483647, %v1079
      %v1082 = vcvt.s32.f32 %v1075
      %v1083 = vmul.f32 %v1082, %v1080
      %v1084 = vxor.u32 %v1083, 2147483648
      %v1085 = vsel %vm964, %v1084, %v1083
      %v1086 = vsub.s32 4, %v1062
      %v1087 = vsel %vm964, %v1086, %v1062
      %v1088 = vsel %vm963, %v338, %v1085
      %v1089 = vsel %vm963, 0, %v1087
      %v1090 = vmul.f32 %v1088, %v1088
      %v1091 = vmul.f32 %v1090, -0.001358992
      %v1092 = vadd.f32 %v1091, 0.041655596
      %v1093 = vmul.f32 %v1090, %v1092
      %v1094 = vadd.f32 %v1093, -0.4999988
      %v1095 = vmul.f32 %v1090, %v1094
      %v1096 = vadd.f32 1.0, %v1095
      %v1097 = vmul.f32 %v1088, %v1088
      %v1098 = vmul.f32 %v1097, -0.00019511016
      %v1099 = vadd.f32 %v1098, 0.008332121
      %v1100 = vmul.f32 %v1097, %v1099
      %v1101 = vadd.f32 %v1100, -0.16666654
      %v1102 = vmul.f32 %v1097, %v1101
      %v1103 = vadd.f32 %v1102, 1.0
      %v1104 = vmul.f32 %v1103, %v1088
      %vm1105 = vweird.f32 %v338
      %v1106 = vadd.s32 %v1089, 3
      %v1107 = vand.u32 %v1106, 3
      %vm1108 = vcmp.lt.s32.totalorder %v1107, 2
      %vm1109 = vcmp.eq.s32.totalorder %v1107, 0
      %v1110 = vxor.u32 %v1104, 2147483648
      %v1111 = vsel %vm1109, %v1096, %v1110
      %vm1112 = vcmp.eq.s32.totalorder %v1107, 2
      %v1113 = vxor.u32 %v1096, 2147483648
      %v1114 = vsel %vm1112, %v1113, %v1104
      %v1115 = vsel %vm1108, %v1111, %v1114
      %v1116 = vsel %vm1105, nan, %v1115
      %v1117 = vand.u32 2147483647, %v339
      %vm1118 = vcmp.le.f32.partialorder %v1117, 0.7853982
      %vm1119 = vcmp.lt.s32.totalorder %v339, 0
      %v1120 = vand.u32 %v339, 2139095040
      %v1121 = vshrl.u32 %v1120, 23
      %v1122 = vsub.s32 %v1121, 127
      %v1123 = vand.u32 2147483647, %v339
      %v1124 = vand.u32 %v1123, 8388607
      %v1125 = vor.u32 %v1124, 8388608
      %v1126 = vsub.s32 0, %v1125
      %v1127 = vadd.s32 %v1122, 1
      %vm1128 = vcmp.gt.s32.totalorder %v1127, 0
      %v1129 = vsel %vm1128, %v1127, 0
      %v1130 = vshrl.u32 %v1129, 5
      %v1131 = vand.u32 %v1129, 31
      %v1132 = vsub.s32 32, %v1131
      %v1133 = vshrl.u32 683565275, %v1132
      %v1134 = vshll.u32 683565275, %v1131
      %v1135 = vshrl.u32 2475754826, %v1132
      %v1136 = vor.u32 %v1134, %v1135
      %v1137 = vshll.u32 2475754826, %v1131
      %v1138 = vshrl.u32 2131351028, %v1132
      %v1139 = vor.u32 %v1137, %v1138
      %v1140 = vshll.u32 2131351028, %v1131
      %v1141 = vshrl.u32 2102212464, %v1132
      %v1142 = vor.u32 %v1140, %v1141
      %v1143 = vshll.u32 2102212464, %v1131
      %v1144 = vshrl.u32 920167782, %v1132
      %v1145 = vor.u32 %v1143, %v1144
      %v1146 = vshll.u32 920167782, %v1131
      %v1147 = vshrl.u32 1326507024, %v1132
      %v1148 = vor.u32 %v1146, %v1147
      %vm1149 = vcmp.lt.s32.totalorder %v1130, 1
      %vm1150 = vcmp.lt.s32.totalorder %v1130, 2
      %vm1151 = vcmp.lt.s32.totalorder %v1130, 3
      %vm1152 = vcmp.lt.s32.totalorder %v1130, 4
      %v1153 = vsel %vm1149, %v1133, %v1136
      %v1154 = vsel %vm1152, %v1142, 2102212464
      %v1155 = vsel %vm1151, %v1139, %v1154
      %v1156 = vsel %vm1150, %v1153, %v1155
      %v1157 = vsel %vm1149, %v1136, %v1139
      %v1158 = vsel %vm1152, %v1145, 920167782
      %v1159 = vsel %vm1151, %v1142, %v1158
      %v1160 = vsel %vm1150, %v1157, %v1159
      %v1161 = vsel %vm1149, %v1139, %v1142
      %v1162 = vsel %vm1152, %v1148, 1326507024
      %v1163 = vsel %vm1151, %v1145, %v1162
      %v1164 = vsel %vm1150, %v1161, %v1163
      %v1165 = vshll.u32 %v1125, 8
      %v1166 = vand.u32 %v1165, 65535
      %v1167 = vshrl.u32 %v1165, 16
      %v1168 = vand.u32 %v1164, 65535
      %v1169 = vshrl.u32 %v1164, 16
      %v1170 = vmul.u32 %v1166, %v1168
      %v1171 = vmul.u32 %v1166, %v1169
      %v1172 = vmul.u32 %v1167, %v1168
      %v1173 = vmul.u32 %v1167, %v1169
      %v1174 = vshll.u32 %v1171, 16
      %v1175 = vshrl.u32 %v1171, 16
      %v1176 = vshll.u32 %v1172, 16
      %v1177 = vshrl.u32 %v1172, 16
      %vm1178 = vc.u32 %v1170, %v1174
      %v1179 = vsel %vm1178, 1, 0
      %v1180 = vadd.s32 %v1170, %v1174
      %v1181 = vadd.s32 %v1173, %v1179
      %vm1182 = vc.u32 %v1180, %v1176
      %v1183 = vsel %vm1182, 1, 0
      %v1184 = vadd.s32 %v1180, %v1176
      %v1185 = vadd.s32 %v1181, %v1183
      %v1186 = vadd.s32 %v1185, %v1175
      %v1187 = vadd.s32 %v1186, %v1177
      %v1188 = vand.u32 %v1165, 65535
      %v1189 = vshrl.u32 %v1165, 16
      %v1190 = vand.u32 %v1160, 65535
      %v1191 = vshrl.u32 %v1160, 16
      %v1192 = vmul.u32 %v1188, %v1190
      %v1193 = vmul.u32 %v1188, %v1191
      %v1194 = vmul.u32 %v1189, %v1190
      %v1195 = vmul.u32 %v1189, %v1191
      %v1196 = vshll.u32 %v1193, 16
      %v1197 = vshrl.u32 %v1193, 16
      %v1198 = vshll.u32 %v1194, 16
      %v1199 = vshrl.u32 %v1194, 16
      %vm1200 = vc.u32 %v1192, %v1196
      %v1201 = vsel %vm1200, 1, 0
      %v1202 = vadd.s32 %v1192, %v1196
      %v1203 = vadd.s32 %v1195, %v1201
      %vm1204 = vc.u32 %v1202, %v1198
      %v1205 = vsel %vm1204, 1, 0
      %v1206 = vadd.s32 %v1202, %v1198
      %v1207 = vadd.s32 %v1203, %v1205
      %v1208 = vadd.s32 %v1207, %v1197
      %v1209 = vadd.s32 %v1208, %v1199
      %v1210 = vmul.u32 %v1165, %v1156
      %v1211 = vadd.s32 %v1187, %v1206
      %vm1212 = vc.u32 %v1187, %v1206
      %v1213 = vadd.s32 %v1209, 1
      %v1214 = vsel %vm1212, %v1213, %v1209
      %v1215 = vadd.s32 %v1210, %v1214
      %v1216 = vadd.s32 %v1215, 536870912
      %v1217 = vshrl.u32 %v1216, 30
      %v1218 = vshll.u32 %v1217, 30
      %v1219 = vsub.s32 %v1215, %v1218
      %vm1220 = vcmp.lt.s32.totalorder %v1219, 0
      %v1221 = vsub.s32 0, %v1219
      %v1222 = vsel %vm1220, %v1221, %v1219
      %v1223 = vclz %v1222
      %v1224 = vsub.s32 %v1223, 2
      %vm1225 = vcmp.gt.s32.totalorder 0, %v1224
      %v1226 = vsel %vm1225, 0, %v1224
      %v1227 = vsub.s32 32, %v1226
      %v1228 = vshll.u32 %v1219, %v1226
      %v1229 = vshrl.u32 %v1211, %v1227
      %v1230 = vor.u32 %v1228, %v1229
      %v1231 = vsub.s32 4294967266, %v1226
      %v1232 = vadd.s32 %v1231, 127
      %v1233 = vshll.u32 %v1232, 23
      %v1234 = vor.u32 4788187, %v1233
      %v1235 = vand.u32 2147483647, %v1234
      %v1237 = vcvt.s32.f32 %v1230
      %v1238 = vmul.f32 %v1237, %v1235
      %v1239 = vxor.u32 %v1238, 2147483648
      %v1240 = vsel %vm1119, %v1239, %v1238
      %v1241 = vsub.s32 4, %v1217
      %v1242 = vsel %vm1119, %v1241, %v1217
      %v1243 = vsel %vm1118, %v339, %v1240
      %v1244 = vsel %vm1118, 0, %v1242
      %v1245 = vmul.f32 %v1243, %v1243
      %v1246 = vmul.f32 %v1245, -0.001358992
      %v1247 = vadd.f32 %v1246, 0.041655596
      %v1248 = vmul.f32 %v1245, %v1247
      %v1249 = vadd.f32 %v1248, -0.4999988
      %v1250 = vmul.f32 %v1245, %v1249
      %v1251 = vadd.f32 1.0, %v1250
      %v1252 = vmul.f32 %v1243, %v1243
      %v1253 = vmul.f32 %v1252, -0.00019511016
      %v1254 = vadd.f32 %v1253, 0.008332121
      %v1255 = vmul.f32 %v1252, %v1254
      %v1256 = vadd.f32 %v1255, -0.16666654
      %v1257 = vmul.f32 %v1252, %v1256
      %v1258 = vadd.f32 %v1257, 1.0
      %v1259 = vmul.f32 %v1258, %v1243
      %vm1260 = vweird.f32 %v339
      %v1261 = vadd.s32 %v1244, 3
      %v1262 = vand.u32 %v1261, 3
      %vm1263 = vcmp.lt.s32.totalorder %v1262, 2
      %vm1264 = vcmp.eq.s32.totalorder %v1262, 0
      %v1265 = vxor.u32 %v1259, 2147483648
      %v1266 = vsel %vm1264, %v1251, %v1265
      %vm1267 = vcmp.eq.s32.totalorder %v1262, 2
      %v1268 = vxor.u32 %v1251, 2147483648
      %v1269 = vsel %vm1267, %v1268, %v1259
      %v1270 = vsel %vm1263, %v1266, %v1269
      %v1271 = vsel %vm1260, nan, %v1270
      %v1272 = vand.u32 2147483647, %v340
      %vm1273 = vcmp.le.f32.partialorder %v1272, 0.7853982
      %vm1274 = vcmp.lt.s32.totalorder %v340, 0
      %v1275 = vand.u32 %v340, 2139095040
      %v1276 = vshrl.u32 %v1275, 23
      %v1277 = vsub.s32 %v1276, 127
      %v1278 = vand.u32 2147483647, %v340
      %v1279 = vand.u32 %v1278, 8388607
      %v1280 = vor.u32 %v1279, 8388608
      %v1281 = vsub.s32 0, %v1280
      %v1282 = vadd.s32 %v1277, 1
      %vm1283 = vcmp.gt.s32.totalorder %v1282, 0
      %v1284 = vsel %vm1283, %v1282, 0
      %v1285 = vshrl.u32 %v1284, 5
      %v1286 = vand.u32 %v1284, 31
      %v1287 = vsub.s32 32, %v1286
      %v1288 = vshrl.u32 683565275, %v1287
      %v1289 = vshll.u32 683565275, %v1286
      %v1290 = vshrl.u32 2475754826, %v1287
      %v1291 = vor.u32 %v1289, %v1290
      %v1292 = vshll.u32 2475754826, %v1286
      %v1293 = vshrl.u32 2131351028, %v1287
      %v1294 = vor.u32 %v1292, %v1293
      %v1295 = vshll.u32 2131351028, %v1286
      %v1296 = vshrl.u32 2102212464, %v1287
      %v1297 = vor.u32 %v1295, %v1296
      %v1298 = vshll.u32 2102212464, %v1286
      %v1299 = vshrl.u32 920167782, %v1287
      %v1300 = vor.u32 %v1298, %v1299
      %v1301 = vshll.u32 920167782, %v1286
      %v1302 = vshrl.u32 1326507024, %v1287
      %v1303 = vor.u32 %v1301, %v1302
      %vm1304 = vcmp.lt.s32.totalorder %v1285, 1
      %vm1305 = vcmp.lt.s32.totalorder %v1285, 2
      %vm1306 = vcmp.lt.s32.totalorder %v1285, 3
      %vm1307 = vcmp.lt.s32.totalorder %v1285, 4
      %v1308 = vsel %vm1304, %v1288, %v1291
      %v1309 = vsel %vm1307, %v1297, 2102212464
      %v1310 = vsel %vm1306, %v1294, %v1309
      %v1311 = vsel %vm1305, %v1308, %v1310
      %v1312 = vsel %vm1304, %v1291, %v1294
      %v1313 = vsel %vm1307, %v1300, 920167782
      %v1314 = vsel %vm1306, %v1297, %v1313
      %v1315 = vsel %vm1305, %v1312, %v1314
      %v1316 = vsel %vm1304, %v1294, %v1297
      %v1317 = vsel %vm1307, %v1303, 1326507024
      %v1318 = vsel %vm1306, %v1300, %v1317
      %v1319 = vsel %vm1305, %v1316, %v1318
      %v1320 = vshll.u32 %v1280, 8
      %v1321 = vand.u32 %v1320, 65535
      %v1322 = vshrl.u32 %v1320, 16
      %v1323 = vand.u32 %v1319, 65535
      %v1324 = vshrl.u32 %v1319, 16
      %v1325 = vmul.u32 %v1321, %v1323
      %v1326 = vmul.u32 %v1321, %v1324
      %v1327 = vmul.u32 %v1322, %v1323
      %v1328 = vmul.u32 %v1322, %v1324
      %v1329 = vshll.u32 %v1326, 16
      %v1330 = vshrl.u32 %v1326, 16
      %v1331 = vshll.u32 %v1327, 16
      %v1332 = vshrl.u32 %v1327, 16
      %vm1333 = vc.u32 %v1325, %v1329
      %v1334 = vsel %vm1333, 1, 0
      %v1335 = vadd.s32 %v1325, %v1329
      %v1336 = vadd.s32 %v1328, %v1334
      %vm1337 = vc.u32 %v1335, %v1331
      %v1338 = vsel %vm1337, 1, 0
      %v1339 = vadd.s32 %v1335, %v1331
      %v1340 = vadd.s32 %v1336, %v1338
      %v1341 = vadd.s32 %v1340, %v1330
      %v1342 = vadd.s32 %v1341, %v1332
      %v1343 = vand.u32 %v1320, 65535
      %v1344 = vshrl.u32 %v1320, 16
      %v1345 = vand.u32 %v1315, 65535
      %v1346 = vshrl.u32 %v1315, 16
      %v1347 = vmul.u32 %v1343, %v1345
      %v1348 = vmul.u32 %v1343, %v1346
      %v1349 = vmul.u32 %v1344, %v1345
      %v1350 = vmul.u32 %v1344, %v1346
      %v1351 = vshll.u32 %v1348, 16
      %v1352 = vshrl.u32 %v1348, 16
      %v1353 = vshll.u32 %v1349, 16
      %v1354 = vshrl.u32 %v1349, 16
      %vm1355 = vc.u32 %v1347, %v1351
      %v1356 = vsel %vm1355, 1, 0
      %v1357 = vadd.s32 %v1347, %v1351
      %v1358 = vadd.s32 %v1350, %v1356
      %vm1359 = vc.u32 %v1357, %v1353
      %v1360 = vsel %vm1359, 1, 0
      %v1361 = vadd.s32 %v1357, %v1353
      %v1362 = vadd.s32 %v1358, %v1360
      %v1363 = vadd.s32 %v1362, %v1352
      %v1364 = vadd.s32 %v1363, %v1354
      %v1365 = vmul.u32 %v1320, %v1311
      %v1366 = vadd.s32 %v1342, %v1361
      %vm1367 = vc.u32 %v1342, %v1361
      %v1368 = vadd.s32 %v1364, 1
      %v1369 = vsel %vm1367, %v1368, %v1364
      %v1370 = vadd.s32 %v1365, %v1369
      %v1371 = vadd.s32 %v1370, 536870912
      %v1372 = vshrl.u32 %v1371, 30
      %v1373 = vshll.u32 %v1372, 30
      %v1374 = vsub.s32 %v1370, %v1373
      %vm1375 = vcmp.lt.s32.totalorder %v1374, 0
      %v1376 = vsub.s32 0, %v1374
      %v1377 = vsel %vm1375, %v1376, %v1374
      %v1378 = vclz %v1377
      %v1379 = vsub.s32 %v1378, 2
      %vm1380 = vcmp.gt.s32.totalorder 0, %v1379
      %v1381 = vsel %vm1380, 0, %v1379
      %v1382 = vsub.s32 32, %v1381
      %v1383 = vshll.u32 %v1374, %v1381
      %v1384 = vshrl.u32 %v1366, %v1382
      %v1385 = vor.u32 %v1383, %v1384
      %v1386 = vsub.s32 4294967266, %v1381
      %v1387 = vadd.s32 %v1386, 127
      %v1388 = vshll.u32 %v1387, 23
      %v1389 = vor.u32 4788187, %v1388
      %v1390 = vand.u32 2147483647, %v1389
      %v1392 = vcvt.s32.f32 %v1385
      %v1393 = vmul.f32 %v1392, %v1390
      %v1394 = vxor.u32 %v1393, 2147483648
      %v1395 = vsel %vm1274, %v1394, %v1393
      %v1396 = vsub.s32 4, %v1372
      %v1397 = vsel %vm1274, %v1396, %v1372
      %v1398 = vsel %vm1273, %v340, %v1395
      %v1399 = vsel %vm1273, 0, %v1397
      %v1400 = vmul.f32 %v1398, %v1398
      %v1401 = vmul.f32 %v1400, -0.001358992
      %v1402 = vadd.f32 %v1401, 0.041655596
      %v1403 = vmul.f32 %v1400, %v1402
      %v1404 = vadd.f32 %v1403, -0.4999988
      %v1405 = vmul.f32 %v1400, %v1404
      %v1406 = vadd.f32 1.0, %v1405
      %v1407 = vmul.f32 %v1398, %v1398
      %v1408 = vmul.f32 %v1407, -0.00019511016
      %v1409 = vadd.f32 %v1408, 0.008332121
      %v1410 = vmul.f32 %v1407, %v1409
      %v1411 = vadd.f32 %v1410, -0.16666654
      %v1412 = vmul.f32 %v1407, %v1411
      %v1413 = vadd.f32 %v1412, 1.0
      %v1414 = vmul.f32 %v1413, %v1398
      %vm1415 = vweird.f32 %v340
      %v1416 = vadd.s32 %v1399, 3
      %v1417 = vand.u32 %v1416, 3
      %vm1418 = vcmp.lt.s32.totalorder %v1417, 2
      %vm1419 = vcmp.eq.s32.totalorder %v1417, 0
      %v1420 = vxor.u32 %v1414, 2147483648
      %v1421 = vsel %vm1419, %v1406, %v1420
      %vm1422 = vcmp.eq.s32.totalorder %v1417, 2
      %v1423 = vxor.u32 %v1406, 2147483648
      %v1424 = vsel %vm1422, %v1423, %v1414
      %v1425 = vsel %vm1418, %v1421, %v1424
      %v1426 = vsel %vm1415, nan, %v1425
      %v1427 = vand.u32 2147483647, %v341
      %vm1428 = vcmp.le.f32.partialorder %v1427, 0.7853982
      %vm1429 = vcmp.lt.s32.totalorder %v341, 0
      %v1430 = vand.u32 %v341, 2139095040
      %v1431 = vshrl.u32 %v1430, 23
      %v1432 = vsub.s32 %v1431, 127
      %v1433 = vand.u32 2147483647, %v341
      %v1434 = vand.u32 %v1433, 8388607
      %v1435 = vor.u32 %v1434, 8388608
      %v1436 = vsub.s32 0, %v1435
      %v1437 = vadd.s32 %v1432, 1
      %vm1438 = vcmp.gt.s32.totalorder %v1437, 0
      %v1439 = vsel %vm1438, %v1437, 0
      %v1440 = vshrl.u32 %v1439, 5
      %v1441 = vand.u32 %v1439, 31
      %v1442 = vsub.s32 32, %v1441
      %v1443 = vshrl.u32 683565275, %v1442
      %v1444 = vshll.u32 683565275, %v1441
      %v1445 = vshrl.u32 2475754826, %v1442
      %v1446 = vor.u32 %v1444, %v1445
      %v1447 = vshll.u32 2475754826, %v1441
      %v1448 = vshrl.u32 2131351028, %v1442
      %v1449 = vor.u32 %v1447, %v1448
      %v1450 = vshll.u32 2131351028, %v1441
      %v1451 = vshrl.u32 2102212464, %v1442
      %v1452 = vor.u32 %v1450, %v1451
      %v1453 = vshll.u32 2102212464, %v1441
      %v1454 = vshrl.u32 920167782, %v1442
      %v1455 = vor.u32 %v1453, %v1454
      %v1456 = vshll.u32 920167782, %v1441
      %v1457 = vshrl.u32 1326507024, %v1442
      %v1458 = vor.u32 %v1456, %v1457
      %vm1459 = vcmp.lt.s32.totalorder %v1440, 1
      %vm1460 = vcmp.lt.s32.totalorder %v1440, 2
      %vm1461 = vcmp.lt.s32.totalorder %v1440, 3
      %vm1462 = vcmp.lt.s32.totalorder %v1440, 4
      %v1463 = vsel %vm1459, %v1443, %v1446
      %v1464 = vsel %vm1462, %v1452, 2102212464
      %v1465 = vsel %vm1461, %v1449, %v1464
      %v1466 = vsel %vm1460, %v1463, %v1465
      %v1467 = vsel %vm1459, %v1446, %v1449
      %v1468 = vsel %vm1462, %v1455, 920167782
      %v1469 = vsel %vm1461, %v1452, %v1468
      %v1470 = vsel %vm1460, %v1467, %v1469
      %v1471 = vsel %vm1459, %v1449, %v1452
      %v1472 = vsel %vm1462, %v1458, 1326507024
      %v1473 = vsel %vm1461, %v1455, %v1472
      %v1474 = vsel %vm1460, %v1471, %v1473
      %v1475 = vshll.u32 %v1435, 8
      %v1476 = vand.u32 %v1475, 65535
      %v1477 = vshrl.u32 %v1475, 16
      %v1478 = vand.u32 %v1474, 65535
      %v1479 = vshrl.u32 %v1474, 16
      %v1480 = vmul.u32 %v1476, %v1478
      %v1481 = vmul.u32 %v1476, %v1479
      %v1482 = vmul.u32 %v1477, %v1478
      %v1483 = vmul.u32 %v1477, %v1479
      %v1484 = vshll.u32 %v1481, 16
      %v1485 = vshrl.u32 %v1481, 16
      %v1486 = vshll.u32 %v1482, 16
      %v1487 = vshrl.u32 %v1482, 16
      %vm1488 = vc.u32 %v1480, %v1484
      %v1489 = vsel %vm1488, 1, 0
      %v1490 = vadd.s32 %v1480, %v1484
      %v1491 = vadd.s32 %v1483, %v1489
      %vm1492 = vc.u32 %v1490, %v1486
      %v1493 = vsel %vm1492, 1, 0
      %v1494 = vadd.s32 %v1490, %v1486
      %v1495 = vadd.s32 %v1491, %v1493
      %v1496 = vadd.s32 %v1495, %v1485
      %v1497 = vadd.s32 %v1496, %v1487
      %v1498 = vand.u32 %v1475, 65535
      %v1499 = vshrl.u32 %v1475, 16
      %v1500 = vand.u32 %v1470, 65535
      %v1501 = vshrl.u32 %v1470, 16
      %v1502 = vmul.u32 %v1498, %v1500
      %v1503 = vmul.u32 %v1498, %v1501
      %v1504 = vmul.u32 %v1499, %v1500
      %v1505 = vmul.u32 %v1499, %v1501
      %v1506 = vshll.u32 %v1503, 16
      %v1507 = vshrl.u32 %v1503, 16
      %v1508 = vshll.u32 %v1504, 16
      %v1509 = vshrl.u32 %v1504, 16
      %vm1510 = vc.u32 %v1502, %v1506
      %v1511 = vsel %vm1510, 1, 0
      %v1512 = vadd.s32 %v1502, %v1506
      %v1513 = vadd.s32 %v1505, %v1511
      %vm1514 = vc.u32 %v1512, %v1508
      %v1515 = vsel %vm1514, 1, 0
      %v1516 = vadd.s32 %v1512, %v1508
      %v1517 = vadd.s32 %v1513, %v1515
      %v1518 = vadd.s32 %v1517, %v1507
      %v1519 = vadd.s32 %v1518, %v1509
      %v1520 = vmul.u32 %v1475, %v1466
      %v1521 = vadd.s32 %v1497, %v1516
      %vm1522 = vc.u32 %v1497, %v1516
      %v1523 = vadd.s32 %v1519, 1
      %v1524 = vsel %vm1522, %v1523, %v1519
      %v1525 = vadd.s32 %v1520, %v1524
      %v1526 = vadd.s32 %v1525, 536870912
      %v1527 = vshrl.u32 %v1526, 30
      %v1528 = vshll.u32 %v1527, 30
      %v1529 = vsub.s32 %v1525, %v1528
      %vm1530 = vcmp.lt.s32.totalorder %v1529, 0
      %v1531 = vsub.s32 0, %v1529
      %v1532 = vsel %vm1530, %v1531, %v1529
      %v1533 = vclz %v1532
      %v1534 = vsub.s32 %v1533, 2
      %vm1535 = vcmp.gt.s32.totalorder 0, %v1534
      %v1536 = vsel %vm1535, 0, %v1534
      %v1537 = vsub.s32 32, %v1536
      %v1538 = vshll.u32 %v1529, %v1536
      %v1539 = vshrl.u32 %v1521, %v1537
      %v1540 = vor.u32 %v1538, %v1539
      %v1541 = vsub.s32 4294967266, %v1536
      %v1542 = vadd.s32 %v1541, 127
      %v1543 = vshll.u32 %v1542, 23
      %v1544 = vor.u32 4788187, %v1543
      %v1545 = vand.u32 2147483647, %v1544
      %v1547 = vcvt.s32.f32 %v1540
      %v1548 = vmul.f32 %v1547, %v1545
      %v1549 = vxor.u32 %v1548, 2147483648
      %v1550 = vsel %vm1429, %v1549, %v1548
      %v1551 = vsub.s32 4, %v1527
      %v1552 = vsel %vm1429, %v1551, %v1527
      %v1553 = vsel %vm1428, %v341, %v1550
      %v1554 = vsel %vm1428, 0, %v1552
      %v1555 = vmul.f32 %v1553, %v1553
      %v1556 = vmul.f32 %v1555, -0.001358992
      %v1557 = vadd.f32 %v1556, 0.041655596
      %v1558 = vmul.f32 %v1555, %v1557
      %v1559 = vadd.f32 %v1558, -0.4999988
      %v1560 = vmul.f32 %v1555, %v1559
      %v1561 = vadd.f32 1.0, %v1560
      %v1562 = vmul.f32 %v1553, %v1553
      %v1563 = vmul.f32 %v1562, -0.00019511016
      %v1564 = vadd.f32 %v1563, 0.008332121
      %v1565 = vmul.f32 %v1562, %v1564
      %v1566 = vadd.f32 %v1565, -0.16666654
      %v1567 = vmul.f32 %v1562, %v1566
      %v1568 = vadd.f32 %v1567, 1.0
      %v1569 = vmul.f32 %v1568, %v1553
      %vm1570 = vweird.f32 %v341
      %v1571 = vadd.s32 %v1554, 3
      %v1572 = vand.u32 %v1571, 3
      %vm1573 = vcmp.lt.s32.totalorder %v1572, 2
      %vm1574 = vcmp.eq.s32.totalorder %v1572, 0
      %v1575 = vxor.u32 %v1569, 2147483648
      %v1576 = vsel %vm1574, %v1561, %v1575
      %vm1577 = vcmp.eq.s32.totalorder %v1572, 2
      %v1578 = vxor.u32 %v1561, 2147483648
      %v1579 = vsel %vm1577, %v1578, %v1569
      %v1580 = vsel %vm1573, %v1576, %v1579
      %v1581 = vsel %vm1570, nan, %v1580
      %vm1582 = vcmask 490496
      %1583 = vst.msk [vmem:[%s172] sm:$0xff] %vm1582, %v496
      %1584 = vst.msk [vmem:[%s172 + $0x8] sm:$0xff] %vm1582, %v651
      %1585 = vst.msk [vmem:[%s172 + $0x10] sm:$0xff] %vm1582, %v806
      %1586 = vst.msk [vmem:[%s172 + $0x18] sm:$0xff] %vm1582, %v961
      %1587 = vst.msk [vmem:[%s172 + $0x20] sm:$0xff] %vm1582, %v1116
      %1588 = vst.msk [vmem:[%s172 + $0x28] sm:$0xff] %vm1582, %v1271
      %1589 = vst.msk [vmem:[%s172 + $0x30] sm:$0xff] %vm1582, %v1426
      %1590 = vst.msk [vmem:[%s172 + $0x38] sm:$0xff] %vm1582, %v1581
      %s1591 = smul.u32 8, %s14
      %p1592 = scmp.lt.s32.totalorder %s1591, 15
      %s1593 = scalar_select %p1592, %s1591, 15
      %s1594 = smul.addr %s1593, 8
      %s1595 = scalar_lea.vmem %s3, %s1594
      // Predicated region
      $region33: #{tpu_custom_call.1} parent=31 // pred_check
        %p1596 = pneg %p100
      $region34: #{tpu_custom_call.1} parent=31 // pred_check_branch
        %1598 = sbr.rel (%p1596) target = $region36
      $region35: #{tpu_custom_call.1} parent=31 // pred_region
        %s1599 = smul.u32 8, %s14
      $region36: #{tpu_custom_call.1} parent=31 // pred_fallthru
        _
    $region32: #{tpu_custom_call.1} parent=5 // pred_fallthru
      _
    %p1600 = scmp.le.s32.totalorder 2, %s9
    // Predicated region
    $region37: #{tpu_custom_call.1} parent=5 // pred_check
      %p1601 = pneg %p1600
    $region38: #{tpu_custom_call.1} parent=5 // pred_check_branch
      %1603 = sbr.rel (%p1601) target = $region40
    $region39: #{tpu_custom_call.1} parent=5 // pred_region
      %s1604 = ssub.s32 %s9, 2
      // Predicated region
      $region41: #{tpu_custom_call.1} parent=39 // pred_check
        %p1605 = pneg %p106
      $region42: #{tpu_custom_call.1} parent=39 // pred_check_branch
        %1607 = sbr.rel (%p1605) target = $region44
      $region43: #{tpu_custom_call.1} parent=39 // pred_region
        %s1608 = smul.u32 8, %s15
        %p1609 = scmp.lt.s32.totalorder %s1608, 15
        %s1610 = scalar_select %p1609, %s1608, 15
        %s1611 = smul.addr %s1610, 8
        %s1612 = scalar_lea.vmem %s3, %s1611
      $region44: #{tpu_custom_call.1} parent=39 // pred_fallthru
        _
    $region40: #{tpu_custom_call.1} parent=5 // pred_fallthru
      _
  $region6: #{tpu_custom_call.1} parent=0 // loop_footer
    %s13 = sadd.s32 1, %s9
  $region7: #{tpu_custom_call.1} parent=0 // loop_footer_branch
    %8 = sbr.rel target = $region3
  $region8: #{tpu_custom_call.1} parent=0 // loop_exit
    _

</llo_original>
